<compile_context>
chip_gen: v6e
topology: v6e:2x2x1
jax: 0.10.0
libtpu: 0.0.40
codegen_flags: <defaults>
</compile_context>

<pallas_src>
import jax
import jax.numpy as jnp
from jax.experimental import pallas as pl
from jax.experimental.pallas import tpu as pltpu

CONTROL_GROUPS_ACT = 5
CONTROL_GROUPS_SELECT = 10
UNIT_EMBEDDING = 10
CONTROL_GROUP_SIZE = 2 * UNIT_EMBEDDING + 1          # 21
DISCRETE_OUTPUT_COUNT = 128
LSTM_SIZE = 1024
HIDDEN = DISCRETE_OUTPUT_COUNT * 2                   # 256
SELECT_DIM = CONTROL_GROUPS_SELECT + 4               # 14
G = CONTROL_GROUPS_SELECT                            # 10 control groups
C = CONTROL_GROUP_SIZE                               # 21
GC = G * C                                           # 210 (flattened cgd width)

SEL_TILED_W = G * CONTROL_GROUPS_SELECT              # 100  (sel_enc tiled per group)
FUSED_W = SEL_TILED_W + G + CONTROL_GROUPS_ACT       # 115  (sel_tiled | attn_pos | act_h)
OUT_W = G + CONTROL_GROUPS_ACT                       # 15   (attention | act_out)


def control_groups_kernel(x_ref, cgd_ref,
                          w1_ref, b1_ref,
                          wf_ref, bf_ref,
                          we_ref, be_ref,
                          ssum_ref, erep_ref, wsel_ref,
                          out_ref):
    # ---- l1 + ELU (bf16 MXU matmul, f32 accumulation) ----
    z = jnp.dot(x_ref[...], w1_ref[...], preferred_element_type=jnp.float32) + b1_ref[...]
    # ELU(alpha=1), with the exp argument clamped so no inf is ever generated.
    h = jnp.where(z > 0, z, jnp.exp(jnp.minimum(z, 0.0)) - 1.0)          # (TM, 256) f32

    # ---- fused head on h: [sel_enc tiled (100) | attn_pos (10) | act_h+ba (5)] ----
    hw = jnp.dot(h.astype(jnp.bfloat16), wf_ref[...],
                 preferred_element_type=jnp.float32) + bf_ref[...]        # (TM, 115) f32
    sel_tiled = hw[:, :SEL_TILED_W]                                       # (TM, 100)
    attn_pos = hw[:, SEL_TILED_W:SEL_TILED_W + G]                         # (TM, 10)
    act_h = hw[:, SEL_TILED_W + G:FUSED_W]                                # (TM, 5)

    # ---- encoder on flattened control-group data (block-diagonal weight) ----
    cgd = cgd_ref[...]                                                    # (TM, 210) f32
    enc = jnp.dot(cgd, we_ref[...],
                  preferred_element_type=jnp.float32) + be_ref[...]       # (TM, 100)

    # ---- attention over the 10 groups: segment-sum via constant 0/1 matrix ----
    attn = jnp.dot(enc * sel_tiled, ssum_ref[...],
                   preferred_element_type=jnp.float32) + attn_pos         # (TM, 10)

    # ---- softmax over groups (EUP exp + approx reciprocal) ----
    m = jnp.max(attn, axis=-1, keepdims=True)
    e = jnp.exp(attn - m)
    probs = e * pl.reciprocal(jnp.sum(e, axis=-1, keepdims=True), approx=True)

    # ---- softmax-weighted pooling of cgd, fused with the action weight ----
    probs_rep = jnp.dot(probs, erep_ref[...],
                        preferred_element_type=jnp.float32)               # (TM, 210)
    act = act_h + jnp.dot(probs_rep * cgd, wsel_ref[...],
                          preferred_element_type=jnp.float32)             # (TM, 5)

    # single lane-contiguous store of both outputs
    out_ref[...] = jnp.concatenate([attn, act], axis=-1)                  # (TM, 15)


def init_params(key, addition=0):
    ks = jax.random.split(key, 7)
    in1 = LSTM_SIZE + addition

    def lin(k, fan_in, fan_out):
        kw, kb = jax.random.split(k)
        s = 1.0 / jnp.sqrt(fan_in)
        w = jax.random.uniform(kw, (fan_in, fan_out), jnp.float32, -s, s)
        b = jax.random.uniform(kb, (1, fan_out), jnp.float32, -s, s)
        return w, b

    w1, b1 = lin(ks[0], in1, HIDDEN)
    w2, b2 = lin(ks[1], HIDDEN, SELECT_DIM)
    we, be = lin(ks[2], CONTROL_GROUP_SIZE, CONTROL_GROUPS_SELECT)
    wa, ba = lin(ks[3], CONTROL_GROUP_SIZE + HIDDEN, CONTROL_GROUPS_ACT)
    pos = jax.random.normal(ks[4], (G, 4), jnp.float32)  # position_encoding (1,1,10,4) squeezed
    return dict(w1=w1, b1=b1, w2=w2, b2=b2, we=we, be=be, pos=pos, wa=wa, ba=ba)


def build_kernel_params(p):
    """Fold l2 / position_encoding / encoder / action_output into a few constant
    matrices so the kernel only does dense, lane-contiguous matmuls."""
    w2, b2 = p["w2"], p["b2"][0]                    # (256,14), (14,)
    wa, ba = p["wa"], p["ba"][0]                    # (277,5),  (5,)
    we, be = p["we"], p["be"][0]                    # (21,10),  (10,)
    pos = p["pos"]                                  # (10, 4)

    # T_tile[k, g*10+k'] = (k==k')    -> tiles sel_enc across the 10 groups
    t_tile = jnp.tile(jnp.eye(G, dtype=jnp.float32), (1, G))               # (10, 100)
    # S_sum[l, g] = (l//10 == g)      -> per-group lane segment sum
    s_sum = jnp.repeat(jnp.eye(G, dtype=jnp.float32), G, axis=0)           # (100, 10)
    # E_rep[g', g*21+c] = (g'==g)     -> repeats probs across the 21 lanes of a group
    e_rep = jnp.repeat(jnp.eye(G, dtype=jnp.float32), C, axis=1)           # (10, 210)

    # Block-diagonal encoder weight: enc_flat[:, g*10+k] = sum_c cgd[:,g,c]*we[c,k]+be[k]
    we_bd = jnp.einsum("gh,ck->gchk", jnp.eye(G, dtype=jnp.float32),
                       we).reshape(GC, SEL_TILED_W)                        # (210, 100)
    be_bd = jnp.tile(be, (G,))[None, :]                                    # (1, 100)

    wa_h, wa_s = wa[:HIDDEN], wa[HIDDEN:]                                  # (256,5), (21,5)
    # selected @ wa_s expressed directly on the masked flattened cgd
    w_sel_act = jnp.tile(wa_s, (G, 1))                                     # (210, 5)

    # Fused head weight on h: [w2_sel tiled | w2_pos @ pos^T | wa_h]
    wf = jnp.concatenate([w2[:, :G] @ t_tile,
                          w2[:, G:] @ pos.T,
                          wa_h], axis=1)                                   # (256, 115)
    bf = jnp.concatenate([b2[:G] @ t_tile,
                          b2[G:] @ pos.T,
                          ba], axis=0)[None, :]                            # (1, 115)

    return dict(
        w1=p["w1"].astype(jnp.bfloat16),
        b1=p["b1"].astype(jnp.float32),
        wf=wf.astype(jnp.bfloat16),
        bf=bf.astype(jnp.float32),
        we_bd=we_bd, be_bd=be_bd,
        s_sum=s_sum, e_rep=e_rep, w_sel_act=w_sel_act,
    )


def control_groups_output(x, control_groups_data, p, *, tm=512):
    B, T, Hin = x.shape
    _, _, Gr, Cr = control_groups_data.shape
    N = B * T

    # bf16 x -> halves the dominant HBM read; cgd stays f32 (data fidelity)
    xf = x.reshape(N, Hin).astype(jnp.bfloat16)
    cf = control_groups_data.reshape(N, Gr * Cr).astype(jnp.float32)

    kp = build_kernel_params(p)

    TM = N if N <= tm else tm                      # full-array block for tiny N
    grid = (pl.cdiv(N, TM),)

    def row_spec(width):
        return pl.BlockSpec((TM, width), lambda i: (i, 0))

    def resident(arr):                             # weights: DMA'd once, stay in VMEM
        return pl.BlockSpec(arr.shape, lambda i: (0, 0))

    out = pl.pallas_call(
        control_groups_kernel,
        grid=grid,
        in_specs=[row_spec(Hin), row_spec(Gr * Cr),
                  resident(kp["w1"]), resident(kp["b1"]),
                  resident(kp["wf"]), resident(kp["bf"]),
                  resident(kp["we_bd"]), resident(kp["be_bd"]),
                  resident(kp["s_sum"]), resident(kp["e_rep"]),
                  resident(kp["w_sel_act"])],
        out_specs=row_spec(OUT_W),
        out_shape=jax.ShapeDtypeStruct((N, OUT_W), jnp.float32),
        compiler_params=pltpu.CompilerParams(
            dimension_semantics=("parallel",),
            vmem_limit_bytes=32 * 1024 * 1024),
    )(xf, cf, kp["w1"], kp["b1"], kp["wf"], kp["bf"],
      kp["we_bd"], kp["be_bd"], kp["s_sum"], kp["e_rep"], kp["w_sel_act"])

    attn = out[:, :Gr].reshape(B, T, Gr)
    act = out[:, Gr:Gr + CONTROL_GROUPS_ACT].reshape(B, T, CONTROL_GROUPS_ACT)
    return attn, act


def reference(x, cgd, p):
    h = jax.nn.elu(x @ p["w1"] + p["b1"][0])
    select = h @ p["w2"] + p["b2"][0]                                   # (B,T,14)
    values = cgd @ p["we"] + p["be"][0]                                 # (B,T,G,10)
    pos_b = jnp.broadcast_to(p["pos"], cgd.shape[:2] + (G, 4))
    values = jnp.concatenate([values, pos_b], axis=-1)                  # (B,T,G,14)
    attention = jnp.einsum("btgk,btk->btg", values, select)             # (B,T,G)
    probs = jax.nn.softmax(attention, axis=-1)
    selected = jnp.einsum("btg,btgc->btc", probs, cgd)                  # (B,T,21)
    act_in = jnp.concatenate([h, selected], axis=-1)                    # (B,T,277)
    act = act_in @ p["wa"] + p["ba"][0]
    return attention, act


if __name__ == "__main__":
    key = jax.random.PRNGKey(0)
    kx, kc, kp = jax.random.split(key, 3)

    B, T = 2, 8
    x = jax.random.normal(kx, (B, T, LSTM_SIZE), jnp.float32)
    control_groups_data = jax.random.normal(
        kc, (B, T, G, CONTROL_GROUP_SIZE), jnp.float32)
    params = init_params(kp)

    attn, act = jax.jit(control_groups_output)(x, control_groups_data, params)
    jax.block_until_ready((attn, act))

    attn_ref, act_ref = reference(x, control_groups_data, params)
    assert attn.shape == (B, T, G) and act.shape == (B, T, CONTROL_GROUPS_ACT)
    # tolerance loosened vs the pure-f32 reference because the dominant matmuls run in bf16
    assert jnp.allclose(attn, attn_ref, atol=3e-2, rtol=3e-2), \
        float(jnp.max(jnp.abs(attn - attn_ref)))
    assert jnp.allclose(act, act_ref, atol=3e-2, rtol=3e-2), \
        float(jnp.max(jnp.abs(act - act_ref)))

    print("KERNEL_OK")
</pallas_src>

<mosaic_0001>
module attributes {stable_mosaic.version = 11 : i64} {
  func.func @control_groups_kernel(%arg0: i32, %arg1: memref<16x1024xbf16, #tpu.memory_space<vmem>>, %arg2: memref<16x210xf32, #tpu.memory_space<vmem>>, %arg3: memref<1024x256xbf16, #tpu.memory_space<vmem>>, %arg4: memref<1x256xf32, #tpu.memory_space<vmem>>, %arg5: memref<256x115xbf16, #tpu.memory_space<vmem>>, %arg6: memref<1x115xf32, #tpu.memory_space<vmem>>, %arg7: memref<210x100xf32, #tpu.memory_space<vmem>>, %arg8: memref<1x100xf32, #tpu.memory_space<vmem>>, %arg9: memref<100x10xf32, #tpu.memory_space<vmem>>, %arg10: memref<10x210xf32, #tpu.memory_space<vmem>>, %arg11: memref<210x5xf32, #tpu.memory_space<vmem>>, %arg12: memref<16x15xf32, #tpu.memory_space<vmem>>) attributes {dimension_semantics = [#tpu.dimension_semantics<parallel>], iteration_bounds = array<i64: 1>, scalar_prefetch = 0 : i64, scratch_operands = 0 : i64, tpu.core_type = #tpu.core_type<tc>, window_params = [{transform_indices = @transform_0, window_bounds = array<i64: 16, 1024>}, {transform_indices = @transform_1, window_bounds = array<i64: 16, 210>}, {pipeline_mode = #tpu.pipeline_mode<synchronous>, transform_indices = @transform_2, window_bounds = array<i64: 1024, 256>}, {pipeline_mode = #tpu.pipeline_mode<synchronous>, transform_indices = @transform_3, window_bounds = array<i64: 1, 256>}, {pipeline_mode = #tpu.pipeline_mode<synchronous>, transform_indices = @transform_4, window_bounds = array<i64: 256, 115>}, {pipeline_mode = #tpu.pipeline_mode<synchronous>, transform_indices = @transform_5, window_bounds = array<i64: 1, 115>}, {pipeline_mode = #tpu.pipeline_mode<synchronous>, transform_indices = @transform_6, window_bounds = array<i64: 210, 100>}, {pipeline_mode = #tpu.pipeline_mode<synchronous>, transform_indices = @transform_7, window_bounds = array<i64: 1, 100>}, {pipeline_mode = #tpu.pipeline_mode<synchronous>, transform_indices = @transform_8, window_bounds = array<i64: 100, 10>}, {pipeline_mode = #tpu.pipeline_mode<synchronous>, transform_indices = @transform_9, window_bounds = array<i64: 10, 210>}, {pipeline_mode = #tpu.pipeline_mode<synchronous>, transform_indices = @transform_10, window_bounds = array<i64: 210, 5>}, {transform_indices = @transform_11, window_bounds = array<i64: 16, 15>}]} {
    %c0 = arith.constant 0 : index
    %c0_0 = arith.constant 0 : index
    %0 = vector.load %arg1[%c0, %c0_0] : memref<16x1024xbf16, #tpu.memory_space<vmem>>, vector<16x1024xbf16>
    %c0_1 = arith.constant 0 : index
    %c0_2 = arith.constant 0 : index
    %1 = vector.load %arg3[%c0_1, %c0_2] : memref<1024x256xbf16, #tpu.memory_space<vmem>>, vector<1024x256xbf16>
    %cst = arith.constant dense<0.000000e+00> : vector<16x256xf32>
    %2 = tpu.matmul %0, %1, %cst {dimension_numbers = #tpu.dot_dimension_numbers<[1], [0], [0], [1], [0, 0, 1, 1], [], []>} : vector<16x1024xbf16>, vector<1024x256xbf16>, vector<16x256xf32> -> vector<16x256xf32>
    %c0_3 = arith.constant 0 : index
    %c0_4 = arith.constant 0 : index
    %3 = vector.load %arg4[%c0_3, %c0_4] : memref<1x256xf32, #tpu.memory_space<vmem>>, vector<1x256xf32>
    %4 = vector.broadcast %3 : vector<1x256xf32> to vector<16x256xf32>
    %5 = arith.addf %2, %4 : vector<16x256xf32>
    %cst_5 = arith.constant 0.000000e+00 : f32
    %6 = vector.broadcast %cst_5 : f32 to vector<16x256xf32>
    %7 = arith.cmpf ogt, %5, %6 : vector<16x256xf32>
    %cst_6 = arith.constant 0.000000e+00 : f32
    %8 = vector.broadcast %cst_6 : f32 to vector<16x256xf32>
    %9 = arith.minimumf %5, %8 : vector<16x256xf32>
    %10 = math.exp %9 : vector<16x256xf32>
    %cst_7 = arith.constant 1.000000e+00 : f32
    %11 = vector.broadcast %cst_7 : f32 to vector<16x256xf32>
    %12 = arith.subf %10, %11 : vector<16x256xf32>
    %13 = arith.select %7, %5, %12 : vector<16x256xi1>, vector<16x256xf32>
    %14 = arith.truncf %13 : vector<16x256xf32> to vector<16x256xbf16>
    %c0_8 = arith.constant 0 : index
    %c0_9 = arith.constant 0 : index
    %15 = vector.load %arg5[%c0_8, %c0_9] : memref<256x115xbf16, #tpu.memory_space<vmem>>, vector<256x115xbf16>
    %cst_10 = arith.constant dense<0.000000e+00> : vector<16x115xf32>
    %16 = tpu.matmul %14, %15, %cst_10 {dimension_numbers = #tpu.dot_dimension_numbers<[1], [0], [0], [1], [0, 0, 1, 1], [], []>} : vector<16x256xbf16>, vector<256x115xbf16>, vector<16x115xf32> -> vector<16x115xf32>
    %c0_11 = arith.constant 0 : index
    %c0_12 = arith.constant 0 : index
    %17 = vector.load %arg6[%c0_11, %c0_12] : memref<1x115xf32, #tpu.memory_space<vmem>>, vector<1x115xf32>
    %18 = vector.broadcast %17 : vector<1x115xf32> to vector<16x115xf32>
    %19 = arith.addf %16, %18 : vector<16x115xf32>
    %20 = vector.extract_strided_slice %19 {offsets = [0, 0], sizes = [16, 100], strides = [1, 1]} : vector<16x115xf32> to vector<16x100xf32>
    %21 = vector.extract_strided_slice %19 {offsets = [0, 100], sizes = [16, 10], strides = [1, 1]} : vector<16x115xf32> to vector<16x10xf32>
    %22 = vector.extract_strided_slice %19 {offsets = [0, 110], sizes = [16, 5], strides = [1, 1]} : vector<16x115xf32> to vector<16x5xf32>
    %c0_13 = arith.constant 0 : index
    %c0_14 = arith.constant 0 : index
    %23 = vector.load %arg2[%c0_13, %c0_14] : memref<16x210xf32, #tpu.memory_space<vmem>>, vector<16x210xf32>
    %c0_15 = arith.constant 0 : index
    %c0_16 = arith.constant 0 : index
    %24 = vector.load %arg7[%c0_15, %c0_16] : memref<210x100xf32, #tpu.memory_space<vmem>>, vector<210x100xf32>
    %cst_17 = arith.constant dense<0.000000e+00> : vector<16x100xf32>
    %25 = tpu.matmul %23, %24, %cst_17 {dimension_numbers = #tpu.dot_dimension_numbers<[1], [0], [0], [1], [0, 0, 1, 1], [], []>} : vector<16x210xf32>, vector<210x100xf32>, vector<16x100xf32> -> vector<16x100xf32>
    %c0_18 = arith.constant 0 : index
    %c0_19 = arith.constant 0 : index
    %26 = vector.load %arg8[%c0_18, %c0_19] : memref<1x100xf32, #tpu.memory_space<vmem>>, vector<1x100xf32>
    %27 = vector.broadcast %26 : vector<1x100xf32> to vector<16x100xf32>
    %28 = arith.addf %25, %27 : vector<16x100xf32>
    %29 = arith.mulf %28, %20 : vector<16x100xf32>
    %c0_20 = arith.constant 0 : index
    %c0_21 = arith.constant 0 : index
    %30 = vector.load %arg9[%c0_20, %c0_21] : memref<100x10xf32, #tpu.memory_space<vmem>>, vector<100x10xf32>
    %cst_22 = arith.constant dense<0.000000e+00> : vector<16x10xf32>
    %31 = tpu.matmul %29, %30, %cst_22 {dimension_numbers = #tpu.dot_dimension_numbers<[1], [0], [0], [1], [0, 0, 1, 1], [], []>} : vector<16x100xf32>, vector<100x10xf32>, vector<16x10xf32> -> vector<16x10xf32>
    %32 = arith.addf %31, %21 : vector<16x10xf32>
    %cst_23 = arith.constant dense<0xFF800000> : vector<16xf32>
    %33 = vector.multi_reduction <maximumf>, %32, %cst_23 [1] : vector<16x10xf32> to vector<16xf32>
    %34 = vector.shape_cast %33 : vector<16xf32> to vector<16x1xf32>
    %35 = vector.broadcast %34 : vector<16x1xf32> to vector<16x10xf32>
    %36 = arith.subf %32, %35 : vector<16x10xf32>
    %37 = math.exp %36 : vector<16x10xf32>
    %cst_24 = arith.constant dense<0.000000e+00> : vector<16xf32>
    %38 = vector.multi_reduction <add>, %37, %cst_24 [1] : vector<16x10xf32> to vector<16xf32>
    %39 = vector.shape_cast %38 : vector<16xf32> to vector<16x1xf32>
    %40 = tpu.reciprocal %39 {approx = true} : vector<16x1xf32> -> vector<16x1xf32>
    %41 = vector.broadcast %40 : vector<16x1xf32> to vector<16x10xf32>
    %42 = arith.mulf %37, %41 : vector<16x10xf32>
    %c0_25 = arith.constant 0 : index
    %c0_26 = arith.constant 0 : index
    %43 = vector.load %arg10[%c0_25, %c0_26] : memref<10x210xf32, #tpu.memory_space<vmem>>, vector<10x210xf32>
    %cst_27 = arith.constant dense<0.000000e+00> : vector<16x210xf32>
    %44 = tpu.matmul %42, %43, %cst_27 {dimension_numbers = #tpu.dot_dimension_numbers<[1], [0], [0], [1], [0, 0, 1, 1], [], []>} : vector<16x10xf32>, vector<10x210xf32>, vector<16x210xf32> -> vector<16x210xf32>
    %45 = arith.mulf %44, %23 : vector<16x210xf32>
    %c0_28 = arith.constant 0 : index
    %c0_29 = arith.constant 0 : index
    %46 = vector.load %arg11[%c0_28, %c0_29] : memref<210x5xf32, #tpu.memory_space<vmem>>, vector<210x5xf32>
    %cst_30 = arith.constant dense<0.000000e+00> : vector<16x5xf32>
    %47 = tpu.matmul %45, %46, %cst_30 {dimension_numbers = #tpu.dot_dimension_numbers<[1], [0], [0], [1], [0, 0, 1, 1], [], []>} : vector<16x210xf32>, vector<210x5xf32>, vector<16x5xf32> -> vector<16x5xf32>
    %48 = arith.addf %22, %47 : vector<16x5xf32>
    %49 = tpu.concatenate %32, %48 in 1 : vector<16x10xf32>, vector<16x5xf32> -> vector<16x15xf32>
    %c0_31 = arith.constant 0 : index
    %c0_32 = arith.constant 0 : index
    %50 = vector.load %arg12[%c0_31, %c0_32] : memref<16x15xf32, #tpu.memory_space<vmem>>, vector<16x15xf32>
    tpu.vector_store %arg12[%c0_31, %c0_32], %49 {strides = array<i32>} : memref<16x15xf32, #tpu.memory_space<vmem>>, vector<16x15xf32>,
    return
  }
  func.func @transform_0(%arg0: i32) -> (i32, i32) {
    %c0_i32 = arith.constant 0 : i32
    %c0_i32_0 = arith.constant 0 : i32
    return %arg0, %c0_i32 : i32, i32
  }
  func.func @transform_1(%arg0: i32) -> (i32, i32) {
    %c0_i32 = arith.constant 0 : i32
    %c0_i32_0 = arith.constant 0 : i32
    return %arg0, %c0_i32 : i32, i32
  }
  func.func @transform_2(%arg0: i32) -> (i32, i32) {
    %c0_i32 = arith.constant 0 : i32
    %c0_i32_0 = arith.constant 0 : i32
    %c0_i32_1 = arith.constant 0 : i32
    return %c0_i32, %c0_i32_0 : i32, i32
  }
  func.func @transform_3(%arg0: i32) -> (i32, i32) {
    %c0_i32 = arith.constant 0 : i32
    %c0_i32_0 = arith.constant 0 : i32
    %c0_i32_1 = arith.constant 0 : i32
    return %c0_i32, %c0_i32_0 : i32, i32
  }
  func.func @transform_4(%arg0: i32) -> (i32, i32) {
    %c0_i32 = arith.constant 0 : i32
    %c0_i32_0 = arith.constant 0 : i32
    %c0_i32_1 = arith.constant 0 : i32
    return %c0_i32, %c0_i32_0 : i32, i32
  }
  func.func @transform_5(%arg0: i32) -> (i32, i32) {
    %c0_i32 = arith.constant 0 : i32
    %c0_i32_0 = arith.constant 0 : i32
    %c0_i32_1 = arith.constant 0 : i32
    return %c0_i32, %c0_i32_0 : i32, i32
  }
  func.func @transform_6(%arg0: i32) -> (i32, i32) {
    %c0_i32 = arith.constant 0 : i32
    %c0_i32_0 = arith.constant 0 : i32
    %c0_i32_1 = arith.constant 0 : i32
    return %c0_i32, %c0_i32_0 : i32, i32
  }
  func.func @transform_7(%arg0: i32) -> (i32, i32) {
    %c0_i32 = arith.constant 0 : i32
    %c0_i32_0 = arith.constant 0 : i32
    %c0_i32_1 = arith.constant 0 : i32
    return %c0_i32, %c0_i32_0 : i32, i32
  }
  func.func @transform_8(%arg0: i32) -> (i32, i32) {
    %c0_i32 = arith.constant 0 : i32
    %c0_i32_0 = arith.constant 0 : i32
    %c0_i32_1 = arith.constant 0 : i32
    return %c0_i32, %c0_i32_0 : i32, i32
  }
  func.func @transform_9(%arg0: i32) -> (i32, i32) {
    %c0_i32 = arith.constant 0 : i32
    %c0_i32_0 = arith.constant 0 : i32
    %c0_i32_1 = arith.constant 0 : i32
    return %c0_i32, %c0_i32_0 : i32, i32
  }
  func.func @transform_10(%arg0: i32) -> (i32, i32) {
    %c0_i32 = arith.constant 0 : i32
    %c0_i32_0 = arith.constant 0 : i32
    %c0_i32_1 = arith.constant 0 : i32
    return %c0_i32, %c0_i32_0 : i32, i32
  }
  func.func @transform_11(%arg0: i32) -> (i32, i32) {
    %c0_i32 = arith.constant 0 : i32
    %c0_i32_0 = arith.constant 0 : i32
    return %arg0, %c0_i32 : i32, i32
  }
}

</mosaic_0001>

<llo_original>
// kernel: tile.18
$region0: #{tile.18}
  %s0 = inlined_call_operand.vmem [shape: f32[10,10,10], index: 0, kind: input, shape index: {}]
  %s1 = inlined_call_operand.vmem [shape: f32[10,100], index: 1, kind: output, shape index: {}]
  %s2 = smov 3
  %v3 = vld [vmem:[%s0] ss:$16 sm:%s2]
  %s4 = smov 12
  %v5 = vld [vmem:[%s0] ss:$16 sm:%s4]
  %vm6 = vcmask 1043458
  %v7 = vsel %vm6, %v5, %v3
  %s8 = smov 48
  %v9 = vld [vmem:[%s0] ss:$16 sm:%s8]
  %vm10 = vcmask 1045508
  %v11 = vsel %vm10, %v9, %v7
  %s12 = smov 192
  %v13 = vld [vmem:[%s0] ss:$16 sm:%s12]
  %vm14 = vcmask 1047558
  %v15 = vsel %vm14, %v13, %v11
  %vm16 = vcmask 80896
  %17 = vst.msk [vmem:[%s1] sm:$0xff] %vm16, %v15
  %s18 = scalar_lea.vmem %s0, 128
  %s19 = smov 3
  %v20 = vld [vmem:[%s18] ss:$16 sm:%s19]
  %vm21 = vcmask 80896
  %s22 = scalar_lea.vmem %s1, 8
  %23 = vst.msk [vmem:[%s22] sm:$0x3] %vm21, %v20
  %s24 = scalar_lea.vmem %s0, 9
  %s25 = smov 3
  %v26 = vld [vmem:[%s24] ss:$16 sm:%s25]
  %s27 = scalar_lea.vmem %s0, 9
  %s28 = smov 12
  %v29 = vld [vmem:[%s27] ss:$16 sm:%s28]
  %vm30 = vcmask 1043458
  %v31 = vsel %vm30, %v29, %v26
  %s32 = scalar_lea.vmem %s0, 9
  %s33 = smov 48
  %v34 = vld [vmem:[%s32] ss:$16 sm:%s33]
  %vm35 = vcmask 1045508
  %v36 = vsel %vm35, %v34, %v31
  %s37 = scalar_lea.vmem %s0, 9
  %s38 = smov 192
  %v39 = vld [vmem:[%s37] ss:$16 sm:%s38]
  %vm40 = vcmask 1047558
  %v41 = vsel %vm40, %v39, %v36
  %42 = vrot.lane.b32.xlu0 %v41, 90
  %v43 = vpop.permute.xlu0 %42
  %vm44 = vcmask 818896
  %45 = vst.msk [vmem:[%s1] sm:$0xff] %vm44, %v43
  %s46 = scalar_lea.vmem %s0, 137
  %s47 = smov 3
  %v48 = vld [vmem:[%s46] ss:$16 sm:%s47]
  %49 = vrot.lane.b32.xlu0 %v48, 90
  %v50 = vpop.permute.xlu0 %49
  %vm51 = vcmask 818896
  %s52 = scalar_lea.vmem %s1, 8
  %53 = vst.msk [vmem:[%s52] sm:$0x3] %vm51, %v50
  %s54 = scalar_lea.vmem %s0, 8
  %s55 = smov 3
  %v56 = vld [vmem:[%s54] ss:$16 sm:%s55]
  %s57 = scalar_lea.vmem %s0, 8
  %s58 = smov 12
  %v59 = vld [vmem:[%s57] ss:$16 sm:%s58]
  %vm60 = vcmask 1043458
  %v61 = vsel %vm60, %v59, %v56
  %s62 = scalar_lea.vmem %s0, 8
  %s63 = smov 48
  %v64 = vld [vmem:[%s62] ss:$16 sm:%s63]
  %vm65 = vcmask 1045508
  %v66 = vsel %vm65, %v64, %v61
  %s67 = scalar_lea.vmem %s0, 8
  %s68 = smov 192
  %v69 = vld [vmem:[%s67] ss:$16 sm:%s68]
  %vm70 = vcmask 1047558
  %v71 = vsel %vm70, %v69, %v66
  %72 = vrot.lane.b32.xlu0 %v71, 80
  %v73 = vpop.permute.xlu0 %72
  %vm74 = vcmask 736896
  %75 = vst.msk [vmem:[%s1] sm:$0xff] %vm74, %v73
  %s76 = scalar_lea.vmem %s0, 136
  %s77 = smov 3
  %v78 = vld [vmem:[%s76] ss:$16 sm:%s77]
  %79 = vrot.lane.b32.xlu0 %v78, 80
  %v80 = vpop.permute.xlu0 %79
  %vm81 = vcmask 736896
  %s82 = scalar_lea.vmem %s1, 8
  %83 = vst.msk [vmem:[%s82] sm:$0x3] %vm81, %v80
  %s84 = scalar_lea.vmem %s0, 7
  %s85 = smov 3
  %v86 = vld [vmem:[%s84] ss:$16 sm:%s85]
  %s87 = scalar_lea.vmem %s0, 7
  %s88 = smov 12
  %v89 = vld [vmem:[%s87] ss:$16 sm:%s88]
  %vm90 = vcmask 1043458
  %v91 = vsel %vm90, %v89, %v86
  %s92 = scalar_lea.vmem %s0, 7
  %s93 = smov 48
  %v94 = vld [vmem:[%s92] ss:$16 sm:%s93]
  %vm95 = vcmask 1045508
  %v96 = vsel %vm95, %v94, %v91
  %s97 = scalar_lea.vmem %s0, 7
  %s98 = smov 192
  %v99 = vld [vmem:[%s97] ss:$16 sm:%s98]
  %vm100 = vcmask 1047558
  %v101 = vsel %vm100, %v99, %v96
  %102 = vrot.lane.b32.xlu0 %v101, 70
  %v103 = vpop.permute.xlu0 %102
  %vm104 = vcmask 654896
  %105 = vst.msk [vmem:[%s1] sm:$0xff] %vm104, %v103
  %s106 = scalar_lea.vmem %s0, 135
  %s107 = smov 3
  %v108 = vld [vmem:[%s106] ss:$16 sm:%s107]
  %109 = vrot.lane.b32.xlu0 %v108, 70
  %v110 = vpop.permute.xlu0 %109
  %vm111 = vcmask 654896
  %s112 = scalar_lea.vmem %s1, 8
  %113 = vst.msk [vmem:[%s112] sm:$0x3] %vm111, %v110
  %s114 = scalar_lea.vmem %s0, 6
  %s115 = smov 3
  %v116 = vld [vmem:[%s114] ss:$16 sm:%s115]
  %s117 = scalar_lea.vmem %s0, 6
  %s118 = smov 12
  %v119 = vld [vmem:[%s117] ss:$16 sm:%s118]
  %vm120 = vcmask 1043458
  %v121 = vsel %vm120, %v119, %v116
  %s122 = scalar_lea.vmem %s0, 6
  %s123 = smov 48
  %v124 = vld [vmem:[%s122] ss:$16 sm:%s123]
  %vm125 = vcmask 1045508
  %v126 = vsel %vm125, %v124, %v121
  %s127 = scalar_lea.vmem %s0, 6
  %s128 = smov 192
  %v129 = vld [vmem:[%s127] ss:$16 sm:%s128]
  %vm130 = vcmask 1047558
  %v131 = vsel %vm130, %v129, %v126
  %132 = vrot.lane.b32.xlu0 %v131, 60
  %v133 = vpop.permute.xlu0 %132
  %vm134 = vcmask 572896
  %135 = vst.msk [vmem:[%s1] sm:$0xff] %vm134, %v133
  %s136 = scalar_lea.vmem %s0, 134
  %s137 = smov 3
  %v138 = vld [vmem:[%s136] ss:$16 sm:%s137]
  %139 = vrot.lane.b32.xlu0 %v138, 60
  %v140 = vpop.permute.xlu0 %139
  %vm141 = vcmask 572896
  %s142 = scalar_lea.vmem %s1, 8
  %143 = vst.msk [vmem:[%s142] sm:$0x3] %vm141, %v140
  %s144 = scalar_lea.vmem %s0, 5
  %s145 = smov 3
  %v146 = vld [vmem:[%s144] ss:$16 sm:%s145]
  %s147 = scalar_lea.vmem %s0, 5
  %s148 = smov 12
  %v149 = vld [vmem:[%s147] ss:$16 sm:%s148]
  %vm150 = vcmask 1043458
  %v151 = vsel %vm150, %v149, %v146
  %s152 = scalar_lea.vmem %s0, 5
  %s153 = smov 48
  %v154 = vld [vmem:[%s152] ss:$16 sm:%s153]
  %vm155 = vcmask 1045508
  %v156 = vsel %vm155, %v154, %v151
  %s157 = scalar_lea.vmem %s0, 5
  %s158 = smov 192
  %v159 = vld [vmem:[%s157] ss:$16 sm:%s158]
  %vm160 = vcmask 1047558
  %v161 = vsel %vm160, %v159, %v156
  %162 = vrot.lane.b32.xlu0 %v161, 50
  %v163 = vpop.permute.xlu0 %162
  %vm164 = vcmask 490896
  %165 = vst.msk [vmem:[%s1] sm:$0xff] %vm164, %v163
  %s166 = scalar_lea.vmem %s0, 133
  %s167 = smov 3
  %v168 = vld [vmem:[%s166] ss:$16 sm:%s167]
  %169 = vrot.lane.b32.xlu0 %v168, 50
  %v170 = vpop.permute.xlu0 %169
  %vm171 = vcmask 490896
  %s172 = scalar_lea.vmem %s1, 8
  %173 = vst.msk [vmem:[%s172] sm:$0x3] %vm171, %v170
  %s174 = scalar_lea.vmem %s0, 4
  %s175 = smov 3
  %v176 = vld [vmem:[%s174] ss:$16 sm:%s175]
  %s177 = scalar_lea.vmem %s0, 4
  %s178 = smov 12
  %v179 = vld [vmem:[%s177] ss:$16 sm:%s178]
  %vm180 = vcmask 1043458
  %v181 = vsel %vm180, %v179, %v176
  %s182 = scalar_lea.vmem %s0, 4
  %s183 = smov 48
  %v184 = vld [vmem:[%s182] ss:$16 sm:%s183]
  %vm185 = vcmask 1045508
  %v186 = vsel %vm185, %v184, %v181
  %s187 = scalar_lea.vmem %s0, 4
  %s188 = smov 192
  %v189 = vld [vmem:[%s187] ss:$16 sm:%s188]
  %vm190 = vcmask 1047558
  %v191 = vsel %vm190, %v189, %v186
  %192 = vrot.lane.b32.xlu0 %v191, 40
  %v193 = vpop.permute.xlu0 %192
  %vm194 = vcmask 408896
  %195 = vst.msk [vmem:[%s1] sm:$0xff] %vm194, %v193
  %s196 = scalar_lea.vmem %s0, 132
  %s197 = smov 3
  %v198 = vld [vmem:[%s196] ss:$16 sm:%s197]
  %199 = vrot.lane.b32.xlu0 %v198, 40
  %v200 = vpop.permute.xlu0 %199
  %vm201 = vcmask 408896
  %s202 = scalar_lea.vmem %s1, 8
  %203 = vst.msk [vmem:[%s202] sm:$0x3] %vm201, %v200
  %s204 = scalar_lea.vmem %s0, 3
  %s205 = smov 3
  %v206 = vld [vmem:[%s204] ss:$16 sm:%s205]
  %s207 = scalar_lea.vmem %s0, 3
  %s208 = smov 12
  %v209 = vld [vmem:[%s207] ss:$16 sm:%s208]
  %vm210 = vcmask 1043458
  %v211 = vsel %vm210, %v209, %v206
  %s212 = scalar_lea.vmem %s0, 3
  %s213 = smov 48
  %v214 = vld [vmem:[%s212] ss:$16 sm:%s213]
  %vm215 = vcmask 1045508
  %v216 = vsel %vm215, %v214, %v211
  %s217 = scalar_lea.vmem %s0, 3
  %s218 = smov 192
  %v219 = vld [vmem:[%s217] ss:$16 sm:%s218]
  %vm220 = vcmask 1047558
  %v221 = vsel %vm220, %v219, %v216
  %222 = vrot.lane.b32.xlu0 %v221, 30
  %v223 = vpop.permute.xlu0 %222
  %vm224 = vcmask 326896
  %225 = vst.msk [vmem:[%s1] sm:$0xff] %vm224, %v223
  %s226 = scalar_lea.vmem %s0, 131
  %s227 = smov 3
  %v228 = vld [vmem:[%s226] ss:$16 sm:%s227]
  %229 = vrot.lane.b32.xlu0 %v228, 30
  %v230 = vpop.permute.xlu0 %229
  %vm231 = vcmask 326896
  %s232 = scalar_lea.vmem %s1, 8
  %233 = vst.msk [vmem:[%s232] sm:$0x3] %vm231, %v230
  %s234 = scalar_lea.vmem %s0, 2
  %s235 = smov 3
  %v236 = vld [vmem:[%s234] ss:$16 sm:%s235]
  %s237 = scalar_lea.vmem %s0, 2
  %s238 = smov 12
  %v239 = vld [vmem:[%s237] ss:$16 sm:%s238]
  %vm240 = vcmask 1043458
  %v241 = vsel %vm240, %v239, %v236
  %s242 = scalar_lea.vmem %s0, 2
  %s243 = smov 48
  %v244 = vld [vmem:[%s242] ss:$16 sm:%s243]
  %vm245 = vcmask 1045508
  %v246 = vsel %vm245, %v244, %v241
  %s247 = scalar_lea.vmem %s0, 2
  %s248 = smov 192
  %v249 = vld [vmem:[%s247] ss:$16 sm:%s248]
  %vm250 = vcmask 1047558
  %v251 = vsel %vm250, %v249, %v246
  %252 = vrot.lane.b32.xlu0 %v251, 20
  %v253 = vpop.permute.xlu0 %252
  %vm254 = vcmask 244896
  %255 = vst.msk [vmem:[%s1] sm:$0xff] %vm254, %v253
  %s256 = scalar_lea.vmem %s0, 130
  %s257 = smov 3
  %v258 = vld [vmem:[%s256] ss:$16 sm:%s257]
  %259 = vrot.lane.b32.xlu0 %v258, 20
  %v260 = vpop.permute.xlu0 %259
  %vm261 = vcmask 244896
  %s262 = scalar_lea.vmem %s1, 8
  %263 = vst.msk [vmem:[%s262] sm:$0x3] %vm261, %v260
  %s264 = scalar_lea.vmem %s0, 1
  %s265 = smov 3
  %v266 = vld [vmem:[%s264] ss:$16 sm:%s265]
  %s267 = scalar_lea.vmem %s0, 1
  %s268 = smov 12
  %v269 = vld [vmem:[%s267] ss:$16 sm:%s268]
  %vm270 = vcmask 1043458
  %v271 = vsel %vm270, %v269, %v266
  %s272 = scalar_lea.vmem %s0, 1
  %s273 = smov 48
  %v274 = vld [vmem:[%s272] ss:$16 sm:%s273]
  %vm275 = vcmask 1045508
  %v276 = vsel %vm275, %v274, %v271
  %s277 = scalar_lea.vmem %s0, 1
  %s278 = smov 192
  %v279 = vld [vmem:[%s277] ss:$16 sm:%s278]
  %vm280 = vcmask 1047558
  %v281 = vsel %vm280, %v279, %v276
  %282 = vrot.lane.b32.xlu0 %v281, 10
  %v283 = vpop.permute.xlu0 %282
  %vm284 = vcmask 162896
  %285 = vst.msk [vmem:[%s1] sm:$0xff] %vm284, %v283
  %s286 = scalar_lea.vmem %s0, 129
  %s287 = smov 3
  %v288 = vld [vmem:[%s286] ss:$16 sm:%s287]
  %289 = vrot.lane.b32.xlu0 %v288, 10
  %v290 = vpop.permute.xlu0 %289
  %vm291 = vcmask 162896
  %s292 = scalar_lea.vmem %s1, 8
  %293 = vst.msk [vmem:[%s292] sm:$0x3] %vm291, %v290

// kernel: tile.27
$region0: #{tile.27}
  %s0 = inlined_call_operand.vmem [shape: f32[10,21,5], index: 0, kind: input, shape index: {}]
  %s1 = inlined_call_operand.vmem [shape: f32[210,5], index: 1, kind: output, shape index: {}]
  %s2 = smov 3
  %v3 = vld [vmem:[%s0] ss:$16 sm:%s2]
  %s4 = smov 12
  %v5 = vld [vmem:[%s0] ss:$16 sm:%s4]
  %vm6 = vcmask 1043458
  %v7 = vsel %vm6, %v5, %v3
  %s8 = scalar_lea.vmem %s0, 60
  %v9 = vld [vmem:[%s8] sm:$0x10]
  %vm10 = vcmask 1044484
  %v11 = vsel %vm10, %v9, %v7
  %vm12 = vcmask 171008
  %13 = vst.msk [vmem:[%s1] sm:$0x1f] %vm12, %v11
  %s14 = scalar_lea.vmem %s0, 6
  %s15 = smov 3
  %v16 = vld [vmem:[%s14] ss:$16 sm:%s15]
  %s17 = scalar_lea.vmem %s0, 6
  %s18 = smov 12
  %v19 = vld [vmem:[%s17] ss:$16 sm:%s18]
  %vm20 = vcmask 1043458
  %v21 = vsel %vm20, %v19, %v16
  %s22 = scalar_lea.vmem %s0, 66
  %v23 = vld [vmem:[%s22] sm:$0x10]
  %vm24 = vcmask 1044484
  %v25 = vsel %vm24, %v23, %v21
  %s26 = scalar_lea.vmem %s0, 6
  %s27 = smov 3
  %v28 = vld [vmem:[%s26] ss:$16 sm:%s27]
  %s29 = scalar_lea.vmem %s0, 6
  %s30 = smov 12
  %v31 = vld [vmem:[%s29] ss:$16 sm:%s30]
  %vm32 = vcmask 1043458
  %v33 = vsel %vm32, %v31, %v28
  %s34 = scalar_lea.vmem %s0, 66
  %v35 = vld [vmem:[%s34] sm:$0x10]
  %vm36 = vcmask 1044484
  %v37 = vsel %vm36, %v35, %v33
  %vm38 = vcmask 15360
  %v39 = vsel %vm38, %v37, %v25
  %40 = vrot.lane.b32.xlu0 %v39, 126
  %v41 = vpop.permute.xlu0 %40
  %vm42 = vcmask 154624
  %s43 = scalar_lea.vmem %s1, 8
  %44 = vst.msk [vmem:[%s43] sm:$0x1f] %vm42, %v41
  %vm45 = vcmask 1048560
  %46 = vst.msk [vmem:[%s1] sm:$0x1f] %vm45, %v41
  %s47 = scalar_lea.vmem %s0, 5
  %s48 = smov 3
  %v49 = vld [vmem:[%s47] ss:$16 sm:%s48]
  %s50 = scalar_lea.vmem %s0, 5
  %s51 = smov 12
  %v52 = vld [vmem:[%s50] ss:$16 sm:%s51]
  %vm53 = vcmask 1043458
  %v54 = vsel %vm53, %v52, %v49
  %s55 = scalar_lea.vmem %s0, 65
  %v56 = vld [vmem:[%s55] sm:$0x10]
  %vm57 = vcmask 1044484
  %v58 = vsel %vm57, %v56, %v54
  %59 = vrot.lane.b32.xlu0 %v58, 105
  %v60 = vpop.permute.xlu0 %59
  %vm61 = vcmask 1032008
  %62 = vst.msk [vmem:[%s1] sm:$0x1f] %vm61, %v60
  %s63 = scalar_lea.vmem %s0, 4
  %s64 = smov 3
  %v65 = vld [vmem:[%s63] ss:$16 sm:%s64]
  %s66 = scalar_lea.vmem %s0, 4
  %s67 = smov 12
  %v68 = vld [vmem:[%s66] ss:$16 sm:%s67]
  %vm69 = vcmask 1043458
  %v70 = vsel %vm69, %v68, %v65
  %s71 = scalar_lea.vmem %s0, 64
  %v72 = vld [vmem:[%s71] sm:$0x10]
  %vm73 = vcmask 1044484
  %v74 = vsel %vm73, %v72, %v70
  %75 = vrot.lane.b32.xlu0 %v74, 84
  %v76 = vpop.permute.xlu0 %75
  %vm77 = vcmask 859808
  %78 = vst.msk [vmem:[%s1] sm:$0x1f] %vm77, %v76
  %s79 = scalar_lea.vmem %s0, 3
  %s80 = smov 3
  %v81 = vld [vmem:[%s79] ss:$16 sm:%s80]
  %s82 = scalar_lea.vmem %s0, 3
  %s83 = smov 12
  %v84 = vld [vmem:[%s82] ss:$16 sm:%s83]
  %vm85 = vcmask 1043458
  %v86 = vsel %vm85, %v84, %v81
  %s87 = scalar_lea.vmem %s0, 63
  %v88 = vld [vmem:[%s87] sm:$0x10]
  %vm89 = vcmask 1044484
  %v90 = vsel %vm89, %v88, %v86
  %91 = vrot.lane.b32.xlu0 %v90, 63
  %v92 = vpop.permute.xlu0 %91
  %vm93 = vcmask 687608
  %94 = vst.msk [vmem:[%s1] sm:$0x1f] %vm93, %v92
  %s95 = scalar_lea.vmem %s0, 9
  %s96 = smov 3
  %v97 = vld [vmem:[%s95] ss:$16 sm:%s96]
  %s98 = scalar_lea.vmem %s0, 9
  %s99 = smov 12
  %v100 = vld [vmem:[%s98] ss:$16 sm:%s99]
  %vm101 = vcmask 1043458
  %v102 = vsel %vm101, %v100, %v97
  %s103 = scalar_lea.vmem %s0, 69
  %v104 = vld [vmem:[%s103] sm:$0x10]
  %vm105 = vcmask 1044484
  %v106 = vsel %vm105, %v104, %v102
  %107 = vrot.lane.b32.xlu0 %v106, 61
  %v108 = vpop.permute.xlu0 %107
  %vm109 = vcmask 671208
  %s110 = scalar_lea.vmem %s1, 8
  %111 = vst.msk [vmem:[%s110] sm:$0x1f] %vm109, %v108
  %s112 = scalar_lea.vmem %s0, 2
  %s113 = smov 3
  %v114 = vld [vmem:[%s112] ss:$16 sm:%s113]
  %s115 = scalar_lea.vmem %s0, 2
  %s116 = smov 12
  %v117 = vld [vmem:[%s115] ss:$16 sm:%s116]
  %vm118 = vcmask 1043458
  %v119 = vsel %vm118, %v117, %v114
  %s120 = scalar_lea.vmem %s0, 62
  %v121 = vld [vmem:[%s120] sm:$0x10]
  %vm122 = vcmask 1044484
  %v123 = vsel %vm122, %v121, %v119
  %124 = vrot.lane.b32.xlu0 %v123, 42
  %v125 = vpop.permute.xlu0 %124
  %vm126 = vcmask 515408
  %127 = vst.msk [vmem:[%s1] sm:$0x1f] %vm126, %v125
  %s128 = scalar_lea.vmem %s0, 8
  %s129 = smov 3
  %v130 = vld [vmem:[%s128] ss:$16 sm:%s129]
  %s131 = scalar_lea.vmem %s0, 8
  %s132 = smov 12
  %v133 = vld [vmem:[%s131] ss:$16 sm:%s132]
  %vm134 = vcmask 1043458
  %v135 = vsel %vm134, %v133, %v130
  %s136 = scalar_lea.vmem %s0, 68
  %v137 = vld [vmem:[%s136] sm:$0x10]
  %vm138 = vcmask 1044484
  %v139 = vsel %vm138, %v137, %v135
  %140 = vrot.lane.b32.xlu0 %v139, 40
  %v141 = vpop.permute.xlu0 %140
  %vm142 = vcmask 499008
  %s143 = scalar_lea.vmem %s1, 8
  %144 = vst.msk [vmem:[%s143] sm:$0x1f] %vm142, %v141
  %s145 = scalar_lea.vmem %s0, 1
  %s146 = smov 3
  %v147 = vld [vmem:[%s145] ss:$16 sm:%s146]
  %s148 = scalar_lea.vmem %s0, 1
  %s149 = smov 12
  %v150 = vld [vmem:[%s148] ss:$16 sm:%s149]
  %vm151 = vcmask 1043458
  %v152 = vsel %vm151, %v150, %v147
  %s153 = scalar_lea.vmem %s0, 61
  %v154 = vld [vmem:[%s153] sm:$0x10]
  %vm155 = vcmask 1044484
  %v156 = vsel %vm155, %v154, %v152
  %157 = vrot.lane.b32.xlu0 %v156, 21
  %v158 = vpop.permute.xlu0 %157
  %vm159 = vcmask 343208
  %160 = vst.msk [vmem:[%s1] sm:$0x1f] %vm159, %v158
  %s161 = scalar_lea.vmem %s0, 7
  %s162 = smov 3
  %v163 = vld [vmem:[%s161] ss:$16 sm:%s162]
  %s164 = scalar_lea.vmem %s0, 7
  %s165 = smov 12
  %v166 = vld [vmem:[%s164] ss:$16 sm:%s165]
  %vm167 = vcmask 1043458
  %v168 = vsel %vm167, %v166, %v163
  %s169 = scalar_lea.vmem %s0, 67
  %v170 = vld [vmem:[%s169] sm:$0x10]
  %vm171 = vcmask 1044484
  %v172 = vsel %vm171, %v170, %v168
  %173 = vrot.lane.b32.xlu0 %v172, 19
  %v174 = vpop.permute.xlu0 %173
  %vm175 = vcmask 326808
  %s176 = scalar_lea.vmem %s1, 8
  %177 = vst.msk [vmem:[%s176] sm:$0x1f] %vm175, %v174

// kernel: tile.21
$region0: #{tile.21}
  #allocation0 [shape = 's32[1]{0}', space=sflag, size = 0x4, scoped, tag = 'scoped memory for tile.21']
  %s0 = inlined_call_operand.vmem [shape: f32[10], index: 0, kind: input, shape index: {}]
  %s1 = inlined_call_operand.vmem [shape: f32[10,10], index: 1, kind: output, shape index: {}]
  // Predicated region
  $region2: #{tile.21} parent=0 // pred_check
    _
  $region3: #{tile.21} parent=0 // pred_check_branch
    %3 = sbr.rel (0) target = $region5
  $region4: #{tile.21} parent=0 // pred_region
    _
  $region5: #{tile.21} parent=0 // pred_fallthru
    _
  %v4 = vld [vmem:[%s0] ss:$0 sm:$0xff]
  %5 = vst [vmem:[%s1] sm:$0xff] %v4
  %s6 = scalar_lea.vmem %s1, 8
  %7 = vst [vmem:[%s6] sm:$0xff] %v4

// kernel: tile.22
$region0: #{tile.22}
  %s0 = inlined_call_operand.vmem [shape: f32[10,10], index: 0, kind: input, shape index: {}]
  %s1 = inlined_call_operand.vmem [shape: f32[1,100], index: 1, kind: output, shape index: {}]
  $region1: #{tile.22} parent=0
    #allocation0 [shape = 'u8[4096]{0}', space=vmem, size = 0x1000, scoped, tag = 'scoped mem for output reshape']
    %v2 = vld [vmem:[%s0] sm:$0x1]
    %vm3 = vcmask 80896
    %4 = vst.msk [vmem:[#allocation0] sm:$0x1] %vm3, %v2
    %s5 = scalar_lea.vmem %s0, 9
    %v6 = vld [vmem:[%s5] sm:$0x1]
    %7 = vrot.lane.b32.xlu0 %v6, 90
    %v8 = vpop.permute.xlu0 %7
    %vm9 = vcmask 818896
    %10 = vst.msk [vmem:[#allocation0] sm:$0x1] %vm9, %v8
    %s11 = scalar_lea.vmem %s0, 8
    %v12 = vld [vmem:[%s11] sm:$0x1]
    %13 = vrot.lane.b32.xlu0 %v12, 80
    %v14 = vpop.permute.xlu0 %13
    %vm15 = vcmask 736896
    %16 = vst.msk [vmem:[#allocation0] sm:$0x1] %vm15, %v14
    %s17 = scalar_lea.vmem %s0, 7
    %v18 = vld [vmem:[%s17] sm:$0x1]
    %19 = vrot.lane.b32.xlu0 %v18, 70
    %v20 = vpop.permute.xlu0 %19
    %vm21 = vcmask 654896
    %22 = vst.msk [vmem:[#allocation0] sm:$0x1] %vm21, %v20
    %s23 = scalar_lea.vmem %s0, 6
    %v24 = vld [vmem:[%s23] sm:$0x1]
    %25 = vrot.lane.b32.xlu0 %v24, 60
    %v26 = vpop.permute.xlu0 %25
    %vm27 = vcmask 572896
    %28 = vst.msk [vmem:[#allocation0] sm:$0x1] %vm27, %v26
    %s29 = scalar_lea.vmem %s0, 5
    %v30 = vld [vmem:[%s29] sm:$0x1]
    %31 = vrot.lane.b32.xlu0 %v30, 50
    %v32 = vpop.permute.xlu0 %31
    %vm33 = vcmask 490896
    %34 = vst.msk [vmem:[#allocation0] sm:$0x1] %vm33, %v32
    %s35 = scalar_lea.vmem %s0, 4
    %v36 = vld [vmem:[%s35] sm:$0x1]
    %37 = vrot.lane.b32.xlu0 %v36, 40
    %v38 = vpop.permute.xlu0 %37
    %vm39 = vcmask 408896
    %40 = vst.msk [vmem:[#allocation0] sm:$0x1] %vm39, %v38
    %s41 = scalar_lea.vmem %s0, 3
    %v42 = vld [vmem:[%s41] sm:$0x1]
    %43 = vrot.lane.b32.xlu0 %v42, 30
    %v44 = vpop.permute.xlu0 %43
    %vm45 = vcmask 326896
    %46 = vst.msk [vmem:[#allocation0] sm:$0x1] %vm45, %v44
    %s47 = scalar_lea.vmem %s0, 2
    %v48 = vld [vmem:[%s47] sm:$0x1]
    %49 = vrot.lane.b32.xlu0 %v48, 20
    %v50 = vpop.permute.xlu0 %49
    %vm51 = vcmask 244896
    %52 = vst.msk [vmem:[#allocation0] sm:$0x1] %vm51, %v50
    %s53 = scalar_lea.vmem %s0, 1
    %v54 = vld [vmem:[%s53] sm:$0x1]
    %55 = vrot.lane.b32.xlu0 %v54, 10
    %v56 = vpop.permute.xlu0 %55
    %vm57 = vcmask 162896
    %58 = vst.msk [vmem:[#allocation0] sm:$0x1] %vm57, %v56
    %s60 = sshll.u32 1, 1
    %s61 = ssub.s32 %s60, 1
    %v63 = vld [vmem:[#allocation0] sm:%s61]
    %s64 = sshll.u32 1, 1
    %s65 = ssub.s32 %s64, 1
    %66 = vst [vmem:[%s1] sm:%s65] %v63

// kernel: control_groups_output.1
$region0: #{control_groups_output.1}
  #allocation0 [shape = 'u32[]', space=smem, size = 0x4, offset = 0x4, fixed_abs, tag = 'smem constant byte address 0x4 - core index']
  #allocation1 [shape = 'u32[144,128]{1,0:T(1,128)}', space=vmem, size = 0x12000, scoped, tag = 'internal scratch']
  %s0 = inlined_call_operand.vmem [shape: bf16[16,1024], index: 0, kind: input, shape index: {}]
  %s1 = inlined_call_operand.vmem [shape: f32[16,210], index: 1, kind: input, shape index: {}]
  %s2 = inlined_call_operand.vmem [shape: bf16[1024,256], index: 2, kind: input, shape index: {}]
  %s3 = inlined_call_operand.vmem [shape: f32[1,256], index: 3, kind: input, shape index: {}]
  %s4 = inlined_call_operand.vmem [shape: bf16[256,115], index: 4, kind: input, shape index: {}]
  %s5 = inlined_call_operand.vmem [shape: f32[1,115], index: 5, kind: input, shape index: {}]
  %s6 = inlined_call_operand.vmem [shape: f32[210,100], index: 6, kind: input, shape index: {}]
  %s7 = inlined_call_operand.vmem [shape: f32[1,100], index: 7, kind: input, shape index: {}]
  %s8 = inlined_call_operand.vmem [shape: f32[100,10], index: 8, kind: input, shape index: {}]
  %s9 = inlined_call_operand.vmem [shape: f32[10,210], index: 9, kind: input, shape index: {}]
  %s10 = inlined_call_operand.vmem [shape: f32[210,5], index: 10, kind: input, shape index: {}]
  %s11 = inlined_call_operand.vmem [shape: f32[16,15], index: 11, kind: output, shape index: {}]
  %s12 = sld [smem:[#allocation0]]
  $region54: #{control_groups_output.1} parent=0
    _
  %s14 = ssub.s32 1, %s12
  %s15 = scalar_select 0, %s14, %s12
  // Predicated region
  $region2: #{control_groups_output.1} parent=0 // pred_check
    _
  $region3: #{control_groups_output.1} parent=0 // pred_check_branch
    %17 = sbr.rel (0) target = $region5
  $region4: #{control_groups_output.1} parent=0 // pred_region
    _
  $region5: #{control_groups_output.1} parent=0 // pred_fallthru
    _
  // Predicated region
  $region6: #{control_groups_output.1} parent=0 // pred_check
    _
  $region7: #{control_groups_output.1} parent=0 // pred_check_branch
    %19 = sbr.rel (0) target = $region9
  $region8: #{control_groups_output.1} parent=0 // pred_region
    _
  $region9: #{control_groups_output.1} parent=0 // pred_fallthru
    _
  // Predicated region
  $region10: #{control_groups_output.1} parent=0 // pred_check
    _
  $region11: #{control_groups_output.1} parent=0 // pred_check_branch
    %21 = sbr.rel (0) target = $region13
  $region12: #{control_groups_output.1} parent=0 // pred_region
    _
  $region13: #{control_groups_output.1} parent=0 // pred_fallthru
    _
  // Predicated region
  $region14: #{control_groups_output.1} parent=0 // pred_check
    _
  $region15: #{control_groups_output.1} parent=0 // pred_check_branch
    %23 = sbr.rel (0) target = $region17
  $region16: #{control_groups_output.1} parent=0 // pred_region
    _
  $region17: #{control_groups_output.1} parent=0 // pred_fallthru
    _
  // Predicated region
  $region18: #{control_groups_output.1} parent=0 // pred_check
    _
  $region19: #{control_groups_output.1} parent=0 // pred_check_branch
    %25 = sbr.rel (0) target = $region21
  $region20: #{control_groups_output.1} parent=0 // pred_region
    _
  $region21: #{control_groups_output.1} parent=0 // pred_fallthru
    _
  // Predicated region
  $region22: #{control_groups_output.1} parent=0 // pred_check
    _
  $region23: #{control_groups_output.1} parent=0 // pred_check_branch
    %27 = sbr.rel (0) target = $region25
  $region24: #{control_groups_output.1} parent=0 // pred_region
    _
  $region25: #{control_groups_output.1} parent=0 // pred_fallthru
    _
  // Predicated region
  $region26: #{control_groups_output.1} parent=0 // pred_check
    _
  $region27: #{control_groups_output.1} parent=0 // pred_check_branch
    %29 = sbr.rel (0) target = $region29
  $region28: #{control_groups_output.1} parent=0 // pred_region
    _
  $region29: #{control_groups_output.1} parent=0 // pred_fallthru
    _
  // Predicated region
  $region30: #{control_groups_output.1} parent=0 // pred_check
    _
  $region31: #{control_groups_output.1} parent=0 // pred_check_branch
    %31 = sbr.rel (0) target = $region33
  $region32: #{control_groups_output.1} parent=0 // pred_region
    _
  $region33: #{control_groups_output.1} parent=0 // pred_fallthru
    _
  // Predicated region
  $region34: #{control_groups_output.1} parent=0 // pred_check
    _
  $region35: #{control_groups_output.1} parent=0 // pred_check_branch
    %33 = sbr.rel (0) target = $region37
  $region36: #{control_groups_output.1} parent=0 // pred_region
    _
  $region37: #{control_groups_output.1} parent=0 // pred_fallthru
    _
  // Predicated region
  $region38: #{control_groups_output.1} parent=0 // pred_check
    _
  $region39: #{control_groups_output.1} parent=0 // pred_check_branch
    %35 = sbr.rel (0) target = $region41
  $region40: #{control_groups_output.1} parent=0 // pred_region
    _
  $region41: #{control_groups_output.1} parent=0 // pred_fallthru
    _
  // Predicated region
  $region42: #{control_groups_output.1} parent=0 // pred_check
    _
  $region43: #{control_groups_output.1} parent=0 // pred_check_branch
    %37 = sbr.rel (0) target = $region45
  $region44: #{control_groups_output.1} parent=0 // pred_region
    _
  $region45: #{control_groups_output.1} parent=0 // pred_fallthru
    _
  %v39 = vld [vmem:[%s0] sm:$0xff]
  %v40 = vld [vmem:[%s0 + $0x8] sm:$0xff]
  %v41 = vld [vmem:[%s0 + $0x10] sm:$0xff]
  %v42 = vld [vmem:[%s0 + $0x18] sm:$0xff]
  %v43 = vld [vmem:[%s0 + $0x20] sm:$0xff]
  %v44 = vld [vmem:[%s0 + $0x28] sm:$0xff]
  %v45 = vld [vmem:[%s0 + $0x30] sm:$0xff]
  %v46 = vld [vmem:[%s0 + $0x38] sm:$0xff]
  %v47 = vld [vmem:[%s2] sm:$0xff]
  %v48 = vld [vmem:[%s2 + $0x8] sm:$0xff]
  %v49 = vld [vmem:[%s2 + $0x10] sm:$0xff]
  %v50 = vld [vmem:[%s2 + $0x18] sm:$0xff]
  %v51 = vld [vmem:[%s2 + $0x20] sm:$0xff]
  %v52 = vld [vmem:[%s2 + $0x28] sm:$0xff]
  %v53 = vld [vmem:[%s2 + $0x30] sm:$0xff]
  %v54 = vld [vmem:[%s2 + $0x38] sm:$0xff]
  %v55 = vld [vmem:[%s2 + $0x40] sm:$0xff]
  %v56 = vld [vmem:[%s2 + $0x48] sm:$0xff]
  %v57 = vld [vmem:[%s2 + $0x50] sm:$0xff]
  %v58 = vld [vmem:[%s2 + $0x58] sm:$0xff]
  %v59 = vld [vmem:[%s2 + $0x60] sm:$0xff]
  %v60 = vld [vmem:[%s2 + $0x68] sm:$0xff]
  %v61 = vld [vmem:[%s2 + $0x70] sm:$0xff]
  %v62 = vld [vmem:[%s2 + $0x78] sm:$0xff]
  %v63 = vld [vmem:[%s2 + $0x80] sm:$0xff]
  %v64 = vld [vmem:[%s2 + $0x88] sm:$0xff]
  %v65 = vld [vmem:[%s2 + $0x90] sm:$0xff]
  %v66 = vld [vmem:[%s2 + $0x98] sm:$0xff]
  %v67 = vld [vmem:[%s2 + $0xa0] sm:$0xff]
  %v68 = vld [vmem:[%s2 + $0xa8] sm:$0xff]
  %v69 = vld [vmem:[%s2 + $0xb0] sm:$0xff]
  %v70 = vld [vmem:[%s2 + $0xb8] sm:$0xff]
  %v71 = vld [vmem:[%s2 + $0xc0] sm:$0xff]
  %v72 = vld [vmem:[%s2 + $0xc8] sm:$0xff]
  %v73 = vld [vmem:[%s2 + $0xd0] sm:$0xff]
  %v74 = vld [vmem:[%s2 + $0xd8] sm:$0xff]
  %v75 = vld [vmem:[%s2 + $0xe0] sm:$0xff]
  %v76 = vld [vmem:[%s2 + $0xe8] sm:$0xff]
  %v77 = vld [vmem:[%s2 + $0xf0] sm:$0xff]
  %v78 = vld [vmem:[%s2 + $0xf8] sm:$0xff]
  %v79 = vld [vmem:[%s2 + $0x100] sm:$0xff]
  %v80 = vld [vmem:[%s2 + $0x108] sm:$0xff]
  %v81 = vld [vmem:[%s2 + $0x110] sm:$0xff]
  %v82 = vld [vmem:[%s2 + $0x118] sm:$0xff]
  %v83 = vld [vmem:[%s2 + $0x120] sm:$0xff]
  %v84 = vld [vmem:[%s2 + $0x128] sm:$0xff]
  %v85 = vld [vmem:[%s2 + $0x130] sm:$0xff]
  %v86 = vld [vmem:[%s2 + $0x138] sm:$0xff]
  %v87 = vld [vmem:[%s2 + $0x140] sm:$0xff]
  %v88 = vld [vmem:[%s2 + $0x148] sm:$0xff]
  %v89 = vld [vmem:[%s2 + $0x150] sm:$0xff]
  %v90 = vld [vmem:[%s2 + $0x158] sm:$0xff]
  %v91 = vld [vmem:[%s2 + $0x160] sm:$0xff]
  %v92 = vld [vmem:[%s2 + $0x168] sm:$0xff]
  %v93 = vld [vmem:[%s2 + $0x170] sm:$0xff]
  %v94 = vld [vmem:[%s2 + $0x178] sm:$0xff]
  %v95 = vld [vmem:[%s2 + $0x180] sm:$0xff]
  %v96 = vld [vmem:[%s2 + $0x188] sm:$0xff]
  %v97 = vld [vmem:[%s2 + $0x190] sm:$0xff]
  %v98 = vld [vmem:[%s2 + $0x198] sm:$0xff]
  %v99 = vld [vmem:[%s2 + $0x1a0] sm:$0xff]
  %v100 = vld [vmem:[%s2 + $0x1a8] sm:$0xff]
  %v101 = vld [vmem:[%s2 + $0x1b0] sm:$0xff]
  %v102 = vld [vmem:[%s2 + $0x1b8] sm:$0xff]
  %v103 = vld [vmem:[%s2 + $0x1c0] sm:$0xff]
  %v104 = vld [vmem:[%s2 + $0x1c8] sm:$0xff]
  %v105 = vld [vmem:[%s2 + $0x1d0] sm:$0xff]
  %v106 = vld [vmem:[%s2 + $0x1d8] sm:$0xff]
  %v107 = vld [vmem:[%s2 + $0x1e0] sm:$0xff]
  %v108 = vld [vmem:[%s2 + $0x1e8] sm:$0xff]
  %v109 = vld [vmem:[%s2 + $0x1f0] sm:$0xff]
  %v110 = vld [vmem:[%s2 + $0x1f8] sm:$0xff]
  %v111 = vld [vmem:[%s2 + $0x200] sm:$0xff]
  %v112 = vld [vmem:[%s2 + $0x208] sm:$0xff]
  %v113 = vld [vmem:[%s2 + $0x210] sm:$0xff]
  %v114 = vld [vmem:[%s2 + $0x218] sm:$0xff]
  %v115 = vld [vmem:[%s2 + $0x220] sm:$0xff]
  %v116 = vld [vmem:[%s2 + $0x228] sm:$0xff]
  %v117 = vld [vmem:[%s2 + $0x230] sm:$0xff]
  %v118 = vld [vmem:[%s2 + $0x238] sm:$0xff]
  %v119 = vld [vmem:[%s2 + $0x240] sm:$0xff]
  %v120 = vld [vmem:[%s2 + $0x248] sm:$0xff]
  %v121 = vld [vmem:[%s2 + $0x250] sm:$0xff]
  %v122 = vld [vmem:[%s2 + $0x258] sm:$0xff]
  %v123 = vld [vmem:[%s2 + $0x260] sm:$0xff]
  %v124 = vld [vmem:[%s2 + $0x268] sm:$0xff]
  %v125 = vld [vmem:[%s2 + $0x270] sm:$0xff]
  %v126 = vld [vmem:[%s2 + $0x278] sm:$0xff]
  %v127 = vld [vmem:[%s2 + $0x280] sm:$0xff]
  %v128 = vld [vmem:[%s2 + $0x288] sm:$0xff]
  %v129 = vld [vmem:[%s2 + $0x290] sm:$0xff]
  %v130 = vld [vmem:[%s2 + $0x298] sm:$0xff]
  %v131 = vld [vmem:[%s2 + $0x2a0] sm:$0xff]
  %v132 = vld [vmem:[%s2 + $0x2a8] sm:$0xff]
  %v133 = vld [vmem:[%s2 + $0x2b0] sm:$0xff]
  %v134 = vld [vmem:[%s2 + $0x2b8] sm:$0xff]
  %v135 = vld [vmem:[%s2 + $0x2c0] sm:$0xff]
  %v136 = vld [vmem:[%s2 + $0x2c8] sm:$0xff]
  %v137 = vld [vmem:[%s2 + $0x2d0] sm:$0xff]
  %v138 = vld [vmem:[%s2 + $0x2d8] sm:$0xff]
  %v139 = vld [vmem:[%s2 + $0x2e0] sm:$0xff]
  %v140 = vld [vmem:[%s2 + $0x2e8] sm:$0xff]
  %v141 = vld [vmem:[%s2 + $0x2f0] sm:$0xff]
  %v142 = vld [vmem:[%s2 + $0x2f8] sm:$0xff]
  %v143 = vld [vmem:[%s2 + $0x300] sm:$0xff]
  %v144 = vld [vmem:[%s2 + $0x308] sm:$0xff]
  %v145 = vld [vmem:[%s2 + $0x310] sm:$0xff]
  %v146 = vld [vmem:[%s2 + $0x318] sm:$0xff]
  %v147 = vld [vmem:[%s2 + $0x320] sm:$0xff]
  %v148 = vld [vmem:[%s2 + $0x328] sm:$0xff]
  %v149 = vld [vmem:[%s2 + $0x330] sm:$0xff]
  %v150 = vld [vmem:[%s2 + $0x338] sm:$0xff]
  %v151 = vld [vmem:[%s2 + $0x340] sm:$0xff]
  %v152 = vld [vmem:[%s2 + $0x348] sm:$0xff]
  %v153 = vld [vmem:[%s2 + $0x350] sm:$0xff]
  %v154 = vld [vmem:[%s2 + $0x358] sm:$0xff]
  %v155 = vld [vmem:[%s2 + $0x360] sm:$0xff]
  %v156 = vld [vmem:[%s2 + $0x368] sm:$0xff]
  %v157 = vld [vmem:[%s2 + $0x370] sm:$0xff]
  %v158 = vld [vmem:[%s2 + $0x378] sm:$0xff]
  %v159 = vld [vmem:[%s2 + $0x380] sm:$0xff]
  %v160 = vld [vmem:[%s2 + $0x388] sm:$0xff]
  %v161 = vld [vmem:[%s2 + $0x390] sm:$0xff]
  %v162 = vld [vmem:[%s2 + $0x398] sm:$0xff]
  %v163 = vld [vmem:[%s2 + $0x3a0] sm:$0xff]
  %v164 = vld [vmem:[%s2 + $0x3a8] sm:$0xff]
  %v165 = vld [vmem:[%s2 + $0x3b0] sm:$0xff]
  %v166 = vld [vmem:[%s2 + $0x3b8] sm:$0xff]
  %v167 = vld [vmem:[%s2 + $0x3c0] sm:$0xff]
  %v168 = vld [vmem:[%s2 + $0x3c8] sm:$0xff]
  %v169 = vld [vmem:[%s2 + $0x3d0] sm:$0xff]
  %v170 = vld [vmem:[%s2 + $0x3d8] sm:$0xff]
  %v171 = vld [vmem:[%s2 + $0x3e0] sm:$0xff]
  %v172 = vld [vmem:[%s2 + $0x3e8] sm:$0xff]
  %v173 = vld [vmem:[%s2 + $0x3f0] sm:$0xff]
  %v174 = vld [vmem:[%s2 + $0x3f8] sm:$0xff]
  %v175 = vld [vmem:[%s3] sm:$0x3]
  %v177 = vlaneseq
  %v178 = vshrl.u32 %v177, 7
  %v179 = vsub.s32 0, %v178
  %v180 = vrot.slane %v175, %v179
  %v181 = vlaneseq
  %v182 = vshrl.u32 %v181, 7
  %v183 = vsub.s32 1, %v182
  %v184 = vrot.slane %v175, %v183
  %v195 = vunpack.c.l.b16 %v39
  %v196 = vunpack.c.h.b16 %v39
  %v197 = vunpack.c.l.b16 %v40
  %v198 = vunpack.c.h.b16 %v40
  %v199 = vunpack.c.l.b16 %v41
  %v200 = vunpack.c.h.b16 %v41
  %v201 = vunpack.c.l.b16 %v42
  %v202 = vunpack.c.h.b16 %v42
  %v203 = vunpack.c.l.b16 %v43
  %v204 = vunpack.c.h.b16 %v43
  %v205 = vunpack.c.l.b16 %v44
  %v206 = vunpack.c.h.b16 %v44
  %v207 = vunpack.c.l.b16 %v45
  %v208 = vunpack.c.h.b16 %v45
  %v209 = vunpack.c.l.b16 %v46
  %v210 = vunpack.c.h.b16 %v46
  %v211 = vpack.c.b16 %v203, %v195
  %v212 = vpack.c.b16 %v204, %v196
  %v213 = vpack.c.b16 %v205, %v197
  %v214 = vpack.c.b16 %v206, %v198
  %v215 = vpack.c.b16 %v207, %v199
  %v216 = vpack.c.b16 %v208, %v200
  %v217 = vpack.c.b16 %v209, %v201
  %v218 = vpack.c.b16 %v210, %v202
  %v355 = vunpack.c.l.b16 %v47
  %v356 = vunpack.c.h.b16 %v47
  %v357 = vunpack.c.l.b16 %v48
  %v358 = vunpack.c.h.b16 %v48
  %v359 = vunpack.c.l.b16 %v49
  %v360 = vunpack.c.h.b16 %v49
  %v361 = vunpack.c.l.b16 %v50
  %v362 = vunpack.c.h.b16 %v50
  %v363 = vunpack.c.l.b16 %v51
  %v364 = vunpack.c.h.b16 %v51
  %v365 = vunpack.c.l.b16 %v52
  %v366 = vunpack.c.h.b16 %v52
  %v367 = vunpack.c.l.b16 %v53
  %v368 = vunpack.c.h.b16 %v53
  %v369 = vunpack.c.l.b16 %v54
  %v370 = vunpack.c.h.b16 %v54
  %v371 = vunpack.c.l.b16 %v55
  %v372 = vunpack.c.h.b16 %v55
  %v373 = vunpack.c.l.b16 %v56
  %v374 = vunpack.c.h.b16 %v56
  %v375 = vunpack.c.l.b16 %v57
  %v376 = vunpack.c.h.b16 %v57
  %v377 = vunpack.c.l.b16 %v58
  %v378 = vunpack.c.h.b16 %v58
  %v379 = vunpack.c.l.b16 %v59
  %v380 = vunpack.c.h.b16 %v59
  %v381 = vunpack.c.l.b16 %v60
  %v382 = vunpack.c.h.b16 %v60
  %v383 = vunpack.c.l.b16 %v61
  %v384 = vunpack.c.h.b16 %v61
  %v385 = vunpack.c.l.b16 %v62
  %v386 = vunpack.c.h.b16 %v62
  %v387 = vunpack.c.l.b16 %v63
  %v388 = vunpack.c.h.b16 %v63
  %v389 = vunpack.c.l.b16 %v64
  %v390 = vunpack.c.h.b16 %v64
  %v391 = vunpack.c.l.b16 %v65
  %v392 = vunpack.c.h.b16 %v65
  %v393 = vunpack.c.l.b16 %v66
  %v394 = vunpack.c.h.b16 %v66
  %v395 = vunpack.c.l.b16 %v67
  %v396 = vunpack.c.h.b16 %v67
  %v397 = vunpack.c.l.b16 %v68
  %v398 = vunpack.c.h.b16 %v68
  %v399 = vunpack.c.l.b16 %v69
  %v400 = vunpack.c.h.b16 %v69
  %v401 = vunpack.c.l.b16 %v70
  %v402 = vunpack.c.h.b16 %v70
  %v403 = vunpack.c.l.b16 %v71
  %v404 = vunpack.c.h.b16 %v71
  %v405 = vunpack.c.l.b16 %v72
  %v406 = vunpack.c.h.b16 %v72
  %v407 = vunpack.c.l.b16 %v73
  %v408 = vunpack.c.h.b16 %v73
  %v409 = vunpack.c.l.b16 %v74
  %v410 = vunpack.c.h.b16 %v74
  %v411 = vunpack.c.l.b16 %v75
  %v412 = vunpack.c.h.b16 %v75
  %v413 = vunpack.c.l.b16 %v76
  %v414 = vunpack.c.h.b16 %v76
  %v415 = vunpack.c.l.b16 %v77
  %v416 = vunpack.c.h.b16 %v77
  %v417 = vunpack.c.l.b16 %v78
  %v418 = vunpack.c.h.b16 %v78
  %v419 = vunpack.c.l.b16 %v79
  %v420 = vunpack.c.h.b16 %v79
  %v421 = vunpack.c.l.b16 %v80
  %v422 = vunpack.c.h.b16 %v80
  %v423 = vunpack.c.l.b16 %v81
  %v424 = vunpack.c.h.b16 %v81
  %v425 = vunpack.c.l.b16 %v82
  %v426 = vunpack.c.h.b16 %v82
  %v427 = vunpack.c.l.b16 %v83
  %v428 = vunpack.c.h.b16 %v83
  %v429 = vunpack.c.l.b16 %v84
  %v430 = vunpack.c.h.b16 %v84
  %v431 = vunpack.c.l.b16 %v85
  %v432 = vunpack.c.h.b16 %v85
  %v433 = vunpack.c.l.b16 %v86
  %v434 = vunpack.c.h.b16 %v86
  %v435 = vunpack.c.l.b16 %v87
  %v436 = vunpack.c.h.b16 %v87
  %v437 = vunpack.c.l.b16 %v88
  %v438 = vunpack.c.h.b16 %v88
  %v439 = vunpack.c.l.b16 %v89
  %v440 = vunpack.c.h.b16 %v89
  %v441 = vunpack.c.l.b16 %v90
  %v442 = vunpack.c.h.b16 %v90
  %v443 = vunpack.c.l.b16 %v91
  %v444 = vunpack.c.h.b16 %v91
  %v445 = vunpack.c.l.b16 %v92
  %v446 = vunpack.c.h.b16 %v92
  %v447 = vunpack.c.l.b16 %v93
  %v448 = vunpack.c.h.b16 %v93
  %v449 = vunpack.c.l.b16 %v94
  %v450 = vunpack.c.h.b16 %v94
  %v451 = vunpack.c.l.b16 %v95
  %v452 = vunpack.c.h.b16 %v95
  %v453 = vunpack.c.l.b16 %v96
  %v454 = vunpack.c.h.b16 %v96
  %v455 = vunpack.c.l.b16 %v97
  %v456 = vunpack.c.h.b16 %v97
  %v457 = vunpack.c.l.b16 %v98
  %v458 = vunpack.c.h.b16 %v98
  %v459 = vunpack.c.l.b16 %v99
  %v460 = vunpack.c.h.b16 %v99
  %v461 = vunpack.c.l.b16 %v100
  %v462 = vunpack.c.h.b16 %v100
  %v463 = vunpack.c.l.b16 %v101
  %v464 = vunpack.c.h.b16 %v101
  %v465 = vunpack.c.l.b16 %v102
  %v466 = vunpack.c.h.b16 %v102
  %v467 = vunpack.c.l.b16 %v103
  %v468 = vunpack.c.h.b16 %v103
  %v469 = vunpack.c.l.b16 %v104
  %v470 = vunpack.c.h.b16 %v104
  %v471 = vunpack.c.l.b16 %v105
  %v472 = vunpack.c.h.b16 %v105
  %v473 = vunpack.c.l.b16 %v106
  %v474 = vunpack.c.h.b16 %v106
  %v475 = vunpack.c.l.b16 %v107
  %v476 = vunpack.c.h.b16 %v107
  %v477 = vunpack.c.l.b16 %v108
  %v478 = vunpack.c.h.b16 %v108
  %v479 = vunpack.c.l.b16 %v109
  %v480 = vunpack.c.h.b16 %v109
  %v481 = vunpack.c.l.b16 %v110
  %v482 = vunpack.c.h.b16 %v110
  %v483 = vunpack.c.l.b16 %v111
  %v484 = vunpack.c.h.b16 %v111
  %v485 = vunpack.c.l.b16 %v112
  %v486 = vunpack.c.h.b16 %v112
  %v487 = vunpack.c.l.b16 %v113
  %v488 = vunpack.c.h.b16 %v113
  %v489 = vunpack.c.l.b16 %v114
  %v490 = vunpack.c.h.b16 %v114
  %v491 = vunpack.c.l.b16 %v115
  %v492 = vunpack.c.h.b16 %v115
  %v493 = vunpack.c.l.b16 %v116
  %v494 = vunpack.c.h.b16 %v116
  %v495 = vunpack.c.l.b16 %v117
  %v496 = vunpack.c.h.b16 %v117
  %v497 = vunpack.c.l.b16 %v118
  %v498 = vunpack.c.h.b16 %v118
  %v499 = vunpack.c.l.b16 %v119
  %v500 = vunpack.c.h.b16 %v119
  %v501 = vunpack.c.l.b16 %v120
  %v502 = vunpack.c.h.b16 %v120
  %v503 = vunpack.c.l.b16 %v121
  %v504 = vunpack.c.h.b16 %v121
  %v505 = vunpack.c.l.b16 %v122
  %v506 = vunpack.c.h.b16 %v122
  %v507 = vunpack.c.l.b16 %v123
  %v508 = vunpack.c.h.b16 %v123
  %v509 = vunpack.c.l.b16 %v124
  %v510 = vunpack.c.h.b16 %v124
  %v511 = vunpack.c.l.b16 %v125
  %v512 = vunpack.c.h.b16 %v125
  %v513 = vunpack.c.l.b16 %v126
  %v514 = vunpack.c.h.b16 %v126
  %v515 = vunpack.c.l.b16 %v127
  %v516 = vunpack.c.h.b16 %v127
  %v517 = vunpack.c.l.b16 %v128
  %v518 = vunpack.c.h.b16 %v128
  %v519 = vunpack.c.l.b16 %v129
  %v520 = vunpack.c.h.b16 %v129
  %v521 = vunpack.c.l.b16 %v130
  %v522 = vunpack.c.h.b16 %v130
  %v523 = vunpack.c.l.b16 %v131
  %v524 = vunpack.c.h.b16 %v131
  %v525 = vunpack.c.l.b16 %v132
  %v526 = vunpack.c.h.b16 %v132
  %v527 = vunpack.c.l.b16 %v133
  %v528 = vunpack.c.h.b16 %v133
  %v529 = vunpack.c.l.b16 %v134
  %v530 = vunpack.c.h.b16 %v134
  %v531 = vunpack.c.l.b16 %v135
  %v532 = vunpack.c.h.b16 %v135
  %v533 = vunpack.c.l.b16 %v136
  %v534 = vunpack.c.h.b16 %v136
  %v535 = vunpack.c.l.b16 %v137
  %v536 = vunpack.c.h.b16 %v137
  %v537 = vunpack.c.l.b16 %v138
  %v538 = vunpack.c.h.b16 %v138
  %v539 = vunpack.c.l.b16 %v139
  %v540 = vunpack.c.h.b16 %v139
  %v541 = vunpack.c.l.b16 %v140
  %v542 = vunpack.c.h.b16 %v140
  %v543 = vunpack.c.l.b16 %v141
  %v544 = vunpack.c.h.b16 %v141
  %v545 = vunpack.c.l.b16 %v142
  %v546 = vunpack.c.h.b16 %v142
  %v547 = vunpack.c.l.b16 %v143
  %v548 = vunpack.c.h.b16 %v143
  %v549 = vunpack.c.l.b16 %v144
  %v550 = vunpack.c.h.b16 %v144
  %v551 = vunpack.c.l.b16 %v145
  %v552 = vunpack.c.h.b16 %v145
  %v553 = vunpack.c.l.b16 %v146
  %v554 = vunpack.c.h.b16 %v146
  %v555 = vunpack.c.l.b16 %v147
  %v556 = vunpack.c.h.b16 %v147
  %v557 = vunpack.c.l.b16 %v148
  %v558 = vunpack.c.h.b16 %v148
  %v559 = vunpack.c.l.b16 %v149
  %v560 = vunpack.c.h.b16 %v149
  %v561 = vunpack.c.l.b16 %v150
  %v562 = vunpack.c.h.b16 %v150
  %v563 = vunpack.c.l.b16 %v151
  %v564 = vunpack.c.h.b16 %v151
  %v565 = vunpack.c.l.b16 %v152
  %v566 = vunpack.c.h.b16 %v152
  %v567 = vunpack.c.l.b16 %v153
  %v568 = vunpack.c.h.b16 %v153
  %v569 = vunpack.c.l.b16 %v154
  %v570 = vunpack.c.h.b16 %v154
  %v571 = vunpack.c.l.b16 %v155
  %v572 = vunpack.c.h.b16 %v155
  %v573 = vunpack.c.l.b16 %v156
  %v574 = vunpack.c.h.b16 %v156
  %v575 = vunpack.c.l.b16 %v157
  %v576 = vunpack.c.h.b16 %v157
  %v577 = vunpack.c.l.b16 %v158
  %v578 = vunpack.c.h.b16 %v158
  %v579 = vunpack.c.l.b16 %v159
  %v580 = vunpack.c.h.b16 %v159
  %v581 = vunpack.c.l.b16 %v160
  %v582 = vunpack.c.h.b16 %v160
  %v583 = vunpack.c.l.b16 %v161
  %v584 = vunpack.c.h.b16 %v161
  %v585 = vunpack.c.l.b16 %v162
  %v586 = vunpack.c.h.b16 %v162
  %v587 = vunpack.c.l.b16 %v163
  %v588 = vunpack.c.h.b16 %v163
  %v589 = vunpack.c.l.b16 %v164
  %v590 = vunpack.c.h.b16 %v164
  %v591 = vunpack.c.l.b16 %v165
  %v592 = vunpack.c.h.b16 %v165
  %v593 = vunpack.c.l.b16 %v166
  %v594 = vunpack.c.h.b16 %v166
  %v595 = vunpack.c.l.b16 %v167
  %v596 = vunpack.c.h.b16 %v167
  %v597 = vunpack.c.l.b16 %v168
  %v598 = vunpack.c.h.b16 %v168
  %v599 = vunpack.c.l.b16 %v169
  %v600 = vunpack.c.h.b16 %v169
  %v601 = vunpack.c.l.b16 %v170
  %v602 = vunpack.c.h.b16 %v170
  %v603 = vunpack.c.l.b16 %v171
  %v604 = vunpack.c.h.b16 %v171
  %v605 = vunpack.c.l.b16 %v172
  %v606 = vunpack.c.h.b16 %v172
  %v607 = vunpack.c.l.b16 %v173
  %v608 = vunpack.c.h.b16 %v173
  %v609 = vunpack.c.l.b16 %v174
  %v610 = vunpack.c.h.b16 %v174
  %v611 = vpack.c.b16 %v357, %v355
  %v612 = vpack.c.b16 %v358, %v356
  %v613 = vpack.c.b16 %v361, %v359
  %v614 = vpack.c.b16 %v362, %v360
  %v615 = vpack.c.b16 %v365, %v363
  %v616 = vpack.c.b16 %v366, %v364
  %v617 = vpack.c.b16 %v369, %v367
  %v618 = vpack.c.b16 %v370, %v368
  %v619 = vpack.c.b16 %v373, %v371
  %v620 = vpack.c.b16 %v374, %v372
  %v621 = vpack.c.b16 %v377, %v375
  %v622 = vpack.c.b16 %v378, %v376
  %v623 = vpack.c.b16 %v381, %v379
  %v624 = vpack.c.b16 %v382, %v380
  %v625 = vpack.c.b16 %v385, %v383
  %v626 = vpack.c.b16 %v386, %v384
  %v627 = vpack.c.b16 %v389, %v387
  %v628 = vpack.c.b16 %v390, %v388
  %v629 = vpack.c.b16 %v393, %v391
  %v630 = vpack.c.b16 %v394, %v392
  %v631 = vpack.c.b16 %v397, %v395
  %v632 = vpack.c.b16 %v398, %v396
  %v633 = vpack.c.b16 %v401, %v399
  %v634 = vpack.c.b16 %v402, %v400
  %v635 = vpack.c.b16 %v405, %v403
  %v636 = vpack.c.b16 %v406, %v404
  %v637 = vpack.c.b16 %v409, %v407
  %v638 = vpack.c.b16 %v410, %v408
  %v639 = vpack.c.b16 %v413, %v411
  %v640 = vpack.c.b16 %v414, %v412
  %v641 = vpack.c.b16 %v417, %v415
  %v642 = vpack.c.b16 %v418, %v416
  %v643 = vpack.c.b16 %v421, %v419
  %v644 = vpack.c.b16 %v422, %v420
  %v645 = vpack.c.b16 %v425, %v423
  %v646 = vpack.c.b16 %v426, %v424
  %v647 = vpack.c.b16 %v429, %v427
  %v648 = vpack.c.b16 %v430, %v428
  %v649 = vpack.c.b16 %v433, %v431
  %v650 = vpack.c.b16 %v434, %v432
  %v651 = vpack.c.b16 %v437, %v435
  %v652 = vpack.c.b16 %v438, %v436
  %v653 = vpack.c.b16 %v441, %v439
  %v654 = vpack.c.b16 %v442, %v440
  %v655 = vpack.c.b16 %v445, %v443
  %v656 = vpack.c.b16 %v446, %v444
  %v657 = vpack.c.b16 %v449, %v447
  %v658 = vpack.c.b16 %v450, %v448
  %v659 = vpack.c.b16 %v453, %v451
  %v660 = vpack.c.b16 %v454, %v452
  %v661 = vpack.c.b16 %v457, %v455
  %v662 = vpack.c.b16 %v458, %v456
  %v663 = vpack.c.b16 %v461, %v459
  %v664 = vpack.c.b16 %v462, %v460
  %v665 = vpack.c.b16 %v465, %v463
  %v666 = vpack.c.b16 %v466, %v464
  %v667 = vpack.c.b16 %v469, %v467
  %v668 = vpack.c.b16 %v470, %v468
  %v669 = vpack.c.b16 %v473, %v471
  %v670 = vpack.c.b16 %v474, %v472
  %v671 = vpack.c.b16 %v477, %v475
  %v672 = vpack.c.b16 %v478, %v476
  %v673 = vpack.c.b16 %v481, %v479
  %v674 = vpack.c.b16 %v482, %v480
  %v675 = vpack.c.b16 %v485, %v483
  %v676 = vpack.c.b16 %v486, %v484
  %v677 = vpack.c.b16 %v489, %v487
  %v678 = vpack.c.b16 %v490, %v488
  %v679 = vpack.c.b16 %v493, %v491
  %v680 = vpack.c.b16 %v494, %v492
  %v681 = vpack.c.b16 %v497, %v495
  %v682 = vpack.c.b16 %v498, %v496
  %v683 = vpack.c.b16 %v501, %v499
  %v684 = vpack.c.b16 %v502, %v500
  %v685 = vpack.c.b16 %v505, %v503
  %v686 = vpack.c.b16 %v506, %v504
  %v687 = vpack.c.b16 %v509, %v507
  %v688 = vpack.c.b16 %v510, %v508
  %v689 = vpack.c.b16 %v513, %v511
  %v690 = vpack.c.b16 %v514, %v512
  %v691 = vpack.c.b16 %v517, %v515
  %v692 = vpack.c.b16 %v518, %v516
  %v693 = vpack.c.b16 %v521, %v519
  %v694 = vpack.c.b16 %v522, %v520
  %v695 = vpack.c.b16 %v525, %v523
  %v696 = vpack.c.b16 %v526, %v524
  %v697 = vpack.c.b16 %v529, %v527
  %v698 = vpack.c.b16 %v530, %v528
  %v699 = vpack.c.b16 %v533, %v531
  %v700 = vpack.c.b16 %v534, %v532
  %v701 = vpack.c.b16 %v537, %v535
  %v702 = vpack.c.b16 %v538, %v536
  %v703 = vpack.c.b16 %v541, %v539
  %v704 = vpack.c.b16 %v542, %v540
  %v705 = vpack.c.b16 %v545, %v543
  %v706 = vpack.c.b16 %v546, %v544
  %v707 = vpack.c.b16 %v549, %v547
  %v708 = vpack.c.b16 %v550, %v548
  %v709 = vpack.c.b16 %v553, %v551
  %v710 = vpack.c.b16 %v554, %v552
  %v711 = vpack.c.b16 %v557, %v555
  %v712 = vpack.c.b16 %v558, %v556
  %v713 = vpack.c.b16 %v561, %v559
  %v714 = vpack.c.b16 %v562, %v560
  %v715 = vpack.c.b16 %v565, %v563
  %v716 = vpack.c.b16 %v566, %v564
  %v717 = vpack.c.b16 %v569, %v567
  %v718 = vpack.c.b16 %v570, %v568
  %v719 = vpack.c.b16 %v573, %v571
  %v720 = vpack.c.b16 %v574, %v572
  %v721 = vpack.c.b16 %v577, %v575
  %v722 = vpack.c.b16 %v578, %v576
  %v723 = vpack.c.b16 %v581, %v579
  %v724 = vpack.c.b16 %v582, %v580
  %v725 = vpack.c.b16 %v585, %v583
  %v726 = vpack.c.b16 %v586, %v584
  %v727 = vpack.c.b16 %v589, %v587
  %v728 = vpack.c.b16 %v590, %v588
  %v729 = vpack.c.b16 %v593, %v591
  %v730 = vpack.c.b16 %v594, %v592
  %v731 = vpack.c.b16 %v597, %v595
  %v732 = vpack.c.b16 %v598, %v596
  %v733 = vpack.c.b16 %v601, %v599
  %v734 = vpack.c.b16 %v602, %v600
  %v735 = vpack.c.b16 %v605, %v603
  %v736 = vpack.c.b16 %v606, %v604
  %v737 = vpack.c.b16 %v609, %v607
  %v738 = vpack.c.b16 %v610, %v608
  %867 = vmatprep.subr.bf16.mxu0 %v626
  %868 = vmatpush1.bf16.msra.mxu0 %v625
  %869 = vmatprep.subr.bf16.mxu0 %v624
  %870 = vmatpush1.bf16.msra.mxu0 %v623
  %871 = vmatprep.subr.bf16.mxu0 %v622
  %872 = vmatpush1.bf16.msra.mxu0 %v621
  %873 = vmatprep.subr.bf16.mxu0 %v620
  %874 = vmatpush1.bf16.msra.mxu0 %v619
  %875 = vmatprep.subr.bf16.mxu0 %v618
  %876 = vmatpush1.bf16.msra.mxu0 %v617
  %877 = vmatprep.subr.bf16.mxu0 %v616
  %878 = vmatpush1.bf16.msra.mxu0 %v615
  %879 = vmatprep.subr.bf16.mxu0 %v614
  %880 = vmatpush1.bf16.msra.mxu0 %v613
  %881 = vmatprep.subr.bf16.mxu0 %v612
  %882 = vmatpush1.bf16.msra.mxu0 %v611
  %883 = vmatprep.subr.bf16.mxu0 %v642
  %884 = vmatpush2.bf16.msra.mxu0 %v641
  %885 = vmatprep.subr.bf16.mxu0 %v640
  %886 = vmatpush2.bf16.msra.mxu0 %v639
  %887 = vmatprep.subr.bf16.mxu0 %v638
  %888 = vmatpush2.bf16.msra.mxu0 %v637
  %889 = vmatprep.subr.bf16.mxu0 %v636
  %890 = vmatpush2.bf16.msra.mxu0 %v635
  %891 = vmatprep.subr.bf16.mxu0 %v634
  %892 = vmatpush2.bf16.msra.mxu0 %v633
  %893 = vmatprep.subr.bf16.mxu0 %v632
  %894 = vmatpush2.bf16.msra.mxu0 %v631
  %895 = vmatprep.subr.bf16.mxu0 %v630
  %896 = vmatpush2.bf16.msra.mxu0 %v629
  %897 = vmatprep.subr.bf16.mxu0 %v628
  %898 = vmatpush2.bf16.msra.mxu0 %v627
  %899 = vmatprep.mubr.bf16.mxu0 %v212
  %900 = vmatmul.mubr.bf16.gmra.mxu0 %v211
  %v901 = vpop.f32.mrf.mxu0
  %v902 = vadd.f32 %v180, %v901
  %v903 = vpop.f32.mrf.mxu0
  %v904 = vadd.f32 %v184, %v903
  %v905 = vpop.f32.mrf.mxu0
  %v906 = vadd.f32 %v180, %v905
  %v907 = vpop.f32.mrf.mxu0
  %v908 = vadd.f32 %v184, %v907
  %909 = vdwg.mxu0
  %910 = vmatprep.subr.bf16.mxu0 %v658
  %911 = vmatpush1.bf16.msra.mxu0 %v657
  %912 = vmatprep.subr.bf16.mxu0 %v656
  %913 = vmatpush1.bf16.msra.mxu0 %v655
  %914 = vmatprep.subr.bf16.mxu0 %v654
  %915 = vmatpush1.bf16.msra.mxu0 %v653
  %916 = vmatprep.subr.bf16.mxu0 %v652
  %917 = vmatpush1.bf16.msra.mxu0 %v651
  %918 = vmatprep.subr.bf16.mxu0 %v650
  %919 = vmatpush1.bf16.msra.mxu0 %v649
  %920 = vmatprep.subr.bf16.mxu0 %v648
  %921 = vmatpush1.bf16.msra.mxu0 %v647
  %922 = vmatprep.subr.bf16.mxu0 %v646
  %923 = vmatpush1.bf16.msra.mxu0 %v645
  %924 = vmatprep.subr.bf16.mxu0 %v644
  %925 = vmatpush1.bf16.msra.mxu0 %v643
  %926 = vmatprep.subr.bf16.mxu0 %v674
  %927 = vmatpush2.bf16.msra.mxu0 %v673
  %928 = vmatprep.subr.bf16.mxu0 %v672
  %929 = vmatpush2.bf16.msra.mxu0 %v671
  %930 = vmatprep.subr.bf16.mxu0 %v670
  %931 = vmatpush2.bf16.msra.mxu0 %v669
  %932 = vmatprep.subr.bf16.mxu0 %v668
  %933 = vmatpush2.bf16.msra.mxu0 %v667
  %934 = vmatprep.subr.bf16.mxu0 %v666
  %935 = vmatpush2.bf16.msra.mxu0 %v665
  %936 = vmatprep.subr.bf16.mxu0 %v664
  %937 = vmatpush2.bf16.msra.mxu0 %v663
  %938 = vmatprep.subr.bf16.mxu0 %v662
  %939 = vmatpush2.bf16.msra.mxu0 %v661
  %940 = vmatprep.subr.bf16.mxu0 %v660
  %941 = vmatpush2.bf16.msra.mxu0 %v659
  %942 = vmatprep.mubr.bf16.mxu0 %v214
  %943 = vmatmul.mubr.bf16.gmra.mxu0 %v213
  %v944 = vpop.f32.mrf.mxu0
  %v945 = vadd.f32 %v902, %v944
  %v946 = vpop.f32.mrf.mxu0
  %v947 = vadd.f32 %v904, %v946
  %v948 = vpop.f32.mrf.mxu0
  %v949 = vadd.f32 %v906, %v948
  %v950 = vpop.f32.mrf.mxu0
  %v951 = vadd.f32 %v908, %v950
  %952 = vdwg.mxu0
  %953 = vmatprep.subr.bf16.mxu0 %v690
  %954 = vmatpush1.bf16.msra.mxu0 %v689
  %955 = vmatprep.subr.bf16.mxu0 %v688
  %956 = vmatpush1.bf16.msra.mxu0 %v687
  %957 = vmatprep.subr.bf16.mxu0 %v686
  %958 = vmatpush1.bf16.msra.mxu0 %v685
  %959 = vmatprep.subr.bf16.mxu0 %v684
  %960 = vmatpush1.bf16.msra.mxu0 %v683
  %961 = vmatprep.subr.bf16.mxu0 %v682
  %962 = vmatpush1.bf16.msra.mxu0 %v681
  %963 = vmatprep.subr.bf16.mxu0 %v680
  %964 = vmatpush1.bf16.msra.mxu0 %v679
  %965 = vmatprep.subr.bf16.mxu0 %v678
  %966 = vmatpush1.bf16.msra.mxu0 %v677
  %967 = vmatprep.subr.bf16.mxu0 %v676
  %968 = vmatpush1.bf16.msra.mxu0 %v675
  %969 = vmatprep.subr.bf16.mxu0 %v706
  %970 = vmatpush2.bf16.msra.mxu0 %v705
  %971 = vmatprep.subr.bf16.mxu0 %v704
  %972 = vmatpush2.bf16.msra.mxu0 %v703
  %973 = vmatprep.subr.bf16.mxu0 %v702
  %974 = vmatpush2.bf16.msra.mxu0 %v701
  %975 = vmatprep.subr.bf16.mxu0 %v700
  %976 = vmatpush2.bf16.msra.mxu0 %v699
  %977 = vmatprep.subr.bf16.mxu0 %v698
  %978 = vmatpush2.bf16.msra.mxu0 %v697
  %979 = vmatprep.subr.bf16.mxu0 %v696
  %980 = vmatpush2.bf16.msra.mxu0 %v695
  %981 = vmatprep.subr.bf16.mxu0 %v694
  %982 = vmatpush2.bf16.msra.mxu0 %v693
  %983 = vmatprep.subr.bf16.mxu0 %v692
  %984 = vmatpush2.bf16.msra.mxu0 %v691
  %985 = vmatprep.mubr.bf16.mxu0 %v216
  %986 = vmatmul.mubr.bf16.gmra.mxu0 %v215
  %v987 = vpop.f32.mrf.mxu0
  %v988 = vadd.f32 %v945, %v987
  %v989 = vpop.f32.mrf.mxu0
  %v990 = vadd.f32 %v947, %v989
  %v991 = vpop.f32.mrf.mxu0
  %v992 = vadd.f32 %v949, %v991
  %v993 = vpop.f32.mrf.mxu0
  %v994 = vadd.f32 %v951, %v993
  %995 = vdwg.mxu0
  %996 = vmatprep.subr.bf16.mxu0 %v722
  %997 = vmatpush1.bf16.msra.mxu0 %v721
  %998 = vmatprep.subr.bf16.mxu0 %v720
  %999 = vmatpush1.bf16.msra.mxu0 %v719
  %1000 = vmatprep.subr.bf16.mxu0 %v718
  %1001 = vmatpush1.bf16.msra.mxu0 %v717
  %1002 = vmatprep.subr.bf16.mxu0 %v716
  %1003 = vmatpush1.bf16.msra.mxu0 %v715
  %1004 = vmatprep.subr.bf16.mxu0 %v714
  %1005 = vmatpush1.bf16.msra.mxu0 %v713
  %1006 = vmatprep.subr.bf16.mxu0 %v712
  %1007 = vmatpush1.bf16.msra.mxu0 %v711
  %1008 = vmatprep.subr.bf16.mxu0 %v710
  %1009 = vmatpush1.bf16.msra.mxu0 %v709
  %1010 = vmatprep.subr.bf16.mxu0 %v708
  %1011 = vmatpush1.bf16.msra.mxu0 %v707
  %1012 = vmatprep.subr.bf16.mxu0 %v738
  %1013 = vmatpush2.bf16.msra.mxu0 %v737
  %1014 = vmatprep.subr.bf16.mxu0 %v736
  %1015 = vmatpush2.bf16.msra.mxu0 %v735
  %1016 = vmatprep.subr.bf16.mxu0 %v734
  %1017 = vmatpush2.bf16.msra.mxu0 %v733
  %1018 = vmatprep.subr.bf16.mxu0 %v732
  %1019 = vmatpush2.bf16.msra.mxu0 %v731
  %1020 = vmatprep.subr.bf16.mxu0 %v730
  %1021 = vmatpush2.bf16.msra.mxu0 %v729
  %1022 = vmatprep.subr.bf16.mxu0 %v728
  %1023 = vmatpush2.bf16.msra.mxu0 %v727
  %1024 = vmatprep.subr.bf16.mxu0 %v726
  %1025 = vmatpush2.bf16.msra.mxu0 %v725
  %1026 = vmatprep.subr.bf16.mxu0 %v724
  %1027 = vmatpush2.bf16.msra.mxu0 %v723
  %1028 = vmatprep.mubr.bf16.mxu0 %v218
  %1029 = vmatmul.mubr.bf16.gmra.mxu0 %v217
  %v1030 = vpop.f32.mrf.mxu0
  %v1031 = vadd.f32 %v988, %v1030
  %v1032 = vpop.f32.mrf.mxu0
  %v1033 = vadd.f32 %v990, %v1032
  %v1034 = vpop.f32.mrf.mxu0
  %v1035 = vadd.f32 %v992, %v1034
  %v1036 = vpop.f32.mrf.mxu0
  %v1037 = vadd.f32 %v994, %v1036
  %1038 = vdwg.mxu0
  %vm1039 = vcmp.gt.f32.partialorder %v1031, 0.0
  %vm1040 = vcmp.gt.f32.partialorder %v1033, 0.0
  %vm1041 = vcmp.gt.f32.partialorder %v1035, 0.0
  %vm1042 = vcmp.gt.f32.partialorder %v1037, 0.0
  %v1043 = vmin.f32 %v1031, 0.0
  %v1044 = vmin.f32 %v1033, 0.0
  %v1045 = vmin.f32 %v1035, 0.0
  %v1046 = vmin.f32 %v1037, 0.0
  %v1047 = vmul.f32 %v1043, 1.442695
  %v1048 = vpow.pop %v1047
  %v1049 = vmul.f32 %v1044, 1.442695
  %v1050 = vpow.pop %v1049
  %v1051 = vmul.f32 %v1045, 1.442695
  %v1052 = vpow.pop %v1051
  %v1053 = vmul.f32 %v1046, 1.442695
  %v1054 = vpow.pop %v1053
  %v1055 = vsub.f32 %v1048, 1.0
  %v1056 = vsub.f32 %v1050, 1.0
  %v1057 = vsub.f32 %v1052, 1.0
  %v1058 = vsub.f32 %v1054, 1.0
  %v1059 = vsel %vm1039, %v1031, %v1055
  %v1060 = vsel %vm1040, %v1033, %v1056
  %v1061 = vsel %vm1041, %v1035, %v1057
  %v1062 = vsel %vm1042, %v1037, %v1058
  %v1063 = vpack.c.bf16 %v1061, %v1059
  %v1064 = vpack.c.bf16 %v1062, %v1060
  %v1065 = vld [vmem:[%s4] sm:$0xf]
  %v1066 = vld [vmem:[%s4 + $0x4] sm:$0xf]
  %v1067 = vld [vmem:[%s4 + $0x8] sm:$0xf]
  %v1068 = vld [vmem:[%s4 + $0xc] sm:$0xf]
  %v1069 = vld [vmem:[%s4 + $0x10] sm:$0xf]
  %v1070 = vld [vmem:[%s4 + $0x14] sm:$0xf]
  %v1071 = vld [vmem:[%s4 + $0x18] sm:$0xf]
  %v1072 = vld [vmem:[%s4 + $0x1c] sm:$0xf]
  %v1073 = vld [vmem:[%s4 + $0x20] sm:$0xf]
  %v1074 = vld [vmem:[%s4 + $0x24] sm:$0xf]
  %v1075 = vld [vmem:[%s4 + $0x28] sm:$0xf]
  %v1076 = vld [vmem:[%s4 + $0x2c] sm:$0xf]
  %v1077 = vld [vmem:[%s4 + $0x30] sm:$0xf]
  %v1078 = vld [vmem:[%s4 + $0x34] sm:$0xf]
  %v1079 = vld [vmem:[%s4 + $0x38] sm:$0xf]
  %v1080 = vld [vmem:[%s4 + $0x3c] sm:$0xf]
  %v1081 = vld [vmem:[%s4 + $0x40] sm:$0xf]
  %v1082 = vld [vmem:[%s4 + $0x44] sm:$0xf]
  %v1083 = vld [vmem:[%s4 + $0x48] sm:$0xf]
  %v1084 = vld [vmem:[%s4 + $0x4c] sm:$0xf]
  %v1085 = vld [vmem:[%s4 + $0x50] sm:$0xf]
  %v1086 = vld [vmem:[%s4 + $0x54] sm:$0xf]
  %v1087 = vld [vmem:[%s4 + $0x58] sm:$0xf]
  %v1088 = vld [vmem:[%s4 + $0x5c] sm:$0xf]
  %v1089 = vld [vmem:[%s4 + $0x60] sm:$0xf]
  %v1090 = vld [vmem:[%s4 + $0x64] sm:$0xf]
  %v1091 = vld [vmem:[%s4 + $0x68] sm:$0xf]
  %v1092 = vld [vmem:[%s4 + $0x6c] sm:$0xf]
  %v1093 = vld [vmem:[%s4 + $0x70] sm:$0xf]
  %v1094 = vld [vmem:[%s4 + $0x74] sm:$0xf]
  %v1095 = vld [vmem:[%s4 + $0x78] sm:$0xf]
  %v1096 = vld [vmem:[%s4 + $0x7c] sm:$0xf]
  %v1097 = vld [vmem:[%s5] sm:$0x1]
  %v1099 = vlaneseq
  %v1100 = vshrl.u32 %v1099, 7
  %v1101 = vsub.s32 0, %v1100
  %v1102 = vrot.slane %v1097, %v1101
  %v1136 = vunpack.c.l.b16 %v1065
  %v1137 = vunpack.c.l.b16 %v1066
  %v1138 = vunpack.c.l.b16 %v1067
  %v1139 = vunpack.c.l.b16 %v1068
  %v1140 = vunpack.c.l.b16 %v1069
  %v1141 = vunpack.c.l.b16 %v1070
  %v1142 = vunpack.c.l.b16 %v1071
  %v1143 = vunpack.c.l.b16 %v1072
  %v1144 = vunpack.c.l.b16 %v1073
  %v1145 = vunpack.c.l.b16 %v1074
  %v1146 = vunpack.c.l.b16 %v1075
  %v1147 = vunpack.c.l.b16 %v1076
  %v1148 = vunpack.c.l.b16 %v1077
  %v1149 = vunpack.c.l.b16 %v1078
  %v1150 = vunpack.c.l.b16 %v1079
  %v1151 = vunpack.c.l.b16 %v1080
  %v1152 = vunpack.c.l.b16 %v1081
  %v1153 = vunpack.c.l.b16 %v1082
  %v1154 = vunpack.c.l.b16 %v1083
  %v1155 = vunpack.c.l.b16 %v1084
  %v1156 = vunpack.c.l.b16 %v1085
  %v1157 = vunpack.c.l.b16 %v1086
  %v1158 = vunpack.c.l.b16 %v1087
  %v1159 = vunpack.c.l.b16 %v1088
  %v1160 = vunpack.c.l.b16 %v1089
  %v1161 = vunpack.c.l.b16 %v1090
  %v1162 = vunpack.c.l.b16 %v1091
  %v1163 = vunpack.c.l.b16 %v1092
  %v1164 = vunpack.c.l.b16 %v1093
  %v1165 = vunpack.c.l.b16 %v1094
  %v1166 = vunpack.c.l.b16 %v1095
  %v1167 = vunpack.c.l.b16 %v1096
  %v1168 = vpack.c.b16 %v1137, %v1136
  %v1169 = vpack.c.b16 %v1139, %v1138
  %v1170 = vpack.c.b16 %v1141, %v1140
  %v1171 = vpack.c.b16 %v1143, %v1142
  %v1172 = vpack.c.b16 %v1145, %v1144
  %v1173 = vpack.c.b16 %v1147, %v1146
  %v1174 = vpack.c.b16 %v1149, %v1148
  %v1175 = vpack.c.b16 %v1151, %v1150
  %v1176 = vpack.c.b16 %v1153, %v1152
  %v1177 = vpack.c.b16 %v1155, %v1154
  %v1178 = vpack.c.b16 %v1157, %v1156
  %v1179 = vpack.c.b16 %v1159, %v1158
  %v1180 = vpack.c.b16 %v1161, %v1160
  %v1181 = vpack.c.b16 %v1163, %v1162
  %v1182 = vpack.c.b16 %v1165, %v1164
  %v1183 = vpack.c.b16 %v1167, %v1166
  %1200 = vmatprep.subr.bf16.mxu0 0
  %1201 = vmatpush1.bf16.msra.mxu0 %v1175
  %1202 = vmatprep.subr.bf16.mxu0 0
  %1203 = vmatpush1.bf16.msra.mxu0 %v1174
  %1204 = vmatprep.subr.bf16.mxu0 0
  %1205 = vmatpush1.bf16.msra.mxu0 %v1173
  %1206 = vmatprep.subr.bf16.mxu0 0
  %1207 = vmatpush1.bf16.msra.mxu0 %v1172
  %1208 = vmatprep.subr.bf16.mxu0 0
  %1209 = vmatpush1.bf16.msra.mxu0 %v1171
  %1210 = vmatprep.subr.bf16.mxu0 0
  %1211 = vmatpush1.bf16.msra.mxu0 %v1170
  %1212 = vmatprep.subr.bf16.mxu0 0
  %1213 = vmatpush1.bf16.msra.mxu0 %v1169
  %1214 = vmatprep.subr.bf16.mxu0 0
  %1215 = vmatpush1.bf16.msra.mxu0 %v1168
  %1216 = vmatprep.subr.bf16.mxu0 0
  %1217 = vmatpush2.bf16.msra.mxu0 %v1183
  %1218 = vmatprep.subr.bf16.mxu0 0
  %1219 = vmatpush2.bf16.msra.mxu0 %v1182
  %1220 = vmatprep.subr.bf16.mxu0 0
  %1221 = vmatpush2.bf16.msra.mxu0 %v1181
  %1222 = vmatprep.subr.bf16.mxu0 0
  %1223 = vmatpush2.bf16.msra.mxu0 %v1180
  %1224 = vmatprep.subr.bf16.mxu0 0
  %1225 = vmatpush2.bf16.msra.mxu0 %v1179
  %1226 = vmatprep.subr.bf16.mxu0 0
  %1227 = vmatpush2.bf16.msra.mxu0 %v1178
  %1228 = vmatprep.subr.bf16.mxu0 0
  %1229 = vmatpush2.bf16.msra.mxu0 %v1177
  %1230 = vmatprep.subr.bf16.mxu0 0
  %1231 = vmatpush2.bf16.msra.mxu0 %v1176
  %1232 = vmatprep.mubr.bf16.mxu0 %v1064
  %1233 = vmatmul.mubr.bf16.gmra.mxu0 %v1063
  %v1234 = vpop.f32.mrf.mxu0
  %v1235 = vadd.f32 %v1102, %v1234
  %v1236 = vpop.f32.mrf.mxu0
  %v1237 = vpop.f32.mrf.mxu0
  %v1238 = vadd.f32 %v1102, %v1237
  %v1239 = vpop.f32.mrf.mxu0
  %1240 = vdwg.mxu0
  %v1241 = vld [vmem:[%s1] sm:$0xff]
  %v1242 = vld [vmem:[%s1 + $0x8] sm:$0xff]
  %v1243 = vld [vmem:[%s1 + $0x10] sm:$0xff]
  %v1244 = vld [vmem:[%s1 + $0x18] sm:$0xff]
  %v1245 = vld [vmem:[%s6] sm:$0xff]
  %v1246 = vld [vmem:[%s6 + $0x8] sm:$0xff]
  %v1247 = vld [vmem:[%s6 + $0x10] sm:$0xff]
  %v1248 = vld [vmem:[%s6 + $0x18] sm:$0xff]
  %v1249 = vld [vmem:[%s6 + $0x20] sm:$0xff]
  %v1250 = vld [vmem:[%s6 + $0x28] sm:$0xff]
  %v1251 = vld [vmem:[%s6 + $0x30] sm:$0xff]
  %v1252 = vld [vmem:[%s6 + $0x38] sm:$0xff]
  %v1253 = vld [vmem:[%s6 + $0x40] sm:$0xff]
  %v1254 = vld [vmem:[%s6 + $0x48] sm:$0xff]
  %v1255 = vld [vmem:[%s6 + $0x50] sm:$0xff]
  %v1256 = vld [vmem:[%s6 + $0x58] sm:$0xff]
  %v1257 = vld [vmem:[%s6 + $0x60] sm:$0xff]
  %v1258 = vld [vmem:[%s6 + $0x68] sm:$0xff]
  %v1259 = vld [vmem:[%s6 + $0x70] sm:$0xff]
  %v1260 = vld [vmem:[%s6 + $0x78] sm:$0xff]
  %v1261 = vld [vmem:[%s6 + $0x80] sm:$0xff]
  %v1262 = vld [vmem:[%s6 + $0x88] sm:$0xff]
  %v1263 = vld [vmem:[%s6 + $0x90] sm:$0xff]
  %v1264 = vld [vmem:[%s6 + $0x98] sm:$0xff]
  %v1265 = vld [vmem:[%s6 + $0xa0] sm:$0xff]
  %v1266 = vld [vmem:[%s6 + $0xa8] sm:$0xff]
  %v1267 = vld [vmem:[%s6 + $0xb0] sm:$0xff]
  %v1268 = vld [vmem:[%s6 + $0xb8] sm:$0xff]
  %v1269 = vld [vmem:[%s6 + $0xc0] sm:$0xff]
  %v1270 = vld [vmem:[%s6 + $0xc8] sm:$0xff]
  %v1271 = vld [vmem:[%s6 + $0xd0] sm:$0x3]
  %v1272 = vld [vmem:[%s7] sm:$0x1]
  %v1274 = vlaneseq
  %v1275 = vshrl.u32 %v1274, 7
  %v1276 = vsub.s32 0, %v1275
  %v1277 = vrot.slane %v1272, %v1276
  %vm1279 = vcmask 670720
  %v1281 = vsel %vm1279, %v1242, 0
  %v1284 = vsel %vm1279, %v1244, 0
  %vm1286 = vcmask 1041408
  %v1288 = vsel %vm1286, %v1271, 0
  %1290 = vmatprep.subr.mxu0 0.0
  %1291 = vmatpush1.msra.mxu0 %v1260
  %1292 = vmatprep.subr.mxu0 0.0
  %1293 = vmatpush1.msra.mxu0 %v1259
  %1294 = vmatprep.subr.mxu0 0.0
  %1295 = vmatpush1.msra.mxu0 %v1258
  %1296 = vmatprep.subr.mxu0 0.0
  %1297 = vmatpush1.msra.mxu0 %v1257
  %1298 = vmatprep.subr.mxu0 0.0
  %1299 = vmatpush1.msra.mxu0 %v1256
  %1300 = vmatprep.subr.mxu0 0.0
  %1301 = vmatpush1.msra.mxu0 %v1255
  %1302 = vmatprep.subr.mxu0 0.0
  %1303 = vmatpush1.msra.mxu0 %v1254
  %1304 = vmatprep.subr.mxu0 0.0
  %1305 = vmatpush1.msra.mxu0 %v1253
  %1306 = vmatprep.subr.mxu0 0.0
  %1307 = vmatpush1.msra.mxu0 %v1252
  %1308 = vmatprep.subr.mxu0 0.0
  %1309 = vmatpush1.msra.mxu0 %v1251
  %1310 = vmatprep.subr.mxu0 0.0
  %1311 = vmatpush1.msra.mxu0 %v1250
  %1312 = vmatprep.subr.mxu0 0.0
  %1313 = vmatpush1.msra.mxu0 %v1249
  %1314 = vmatprep.subr.mxu0 0.0
  %1315 = vmatpush1.msra.mxu0 %v1248
  %1316 = vmatprep.subr.mxu0 0.0
  %1317 = vmatpush1.msra.mxu0 %v1247
  %1318 = vmatprep.subr.mxu0 0.0
  %1319 = vmatpush1.msra.mxu0 %v1246
  %1320 = vmatprep.subr.mxu0 0.0
  %1321 = vmatpush1.msra.mxu0 %v1245
  %1322 = vmatprep.subr.mxu0 0.0
  %1323 = vmatpush2.msra.mxu0 0.0
  %1324 = vmatprep.subr.mxu0 0.0
  %1325 = vmatpush2.msra.mxu0 0.0
  %1326 = vmatprep.subr.mxu0 0.0
  %1327 = vmatpush2.msra.mxu0 0.0
  %1328 = vmatprep.subr.mxu0 0.0
  %1329 = vmatpush2.msra.mxu0 0.0
  %1330 = vmatprep.subr.mxu0 0.0
  %1331 = vmatpush2.msra.mxu0 0.0
  %1332 = vmatprep.subr.mxu0 0.0
  %1333 = vmatpush2.msra.mxu0 %v1288
  %1334 = vmatprep.subr.mxu0 0.0
  %1335 = vmatpush2.msra.mxu0 %v1270
  %1336 = vmatprep.subr.mxu0 0.0
  %1337 = vmatpush2.msra.mxu0 %v1269
  %1338 = vmatprep.subr.mxu0 0.0
  %1339 = vmatpush2.msra.mxu0 %v1268
  %1340 = vmatprep.subr.mxu0 0.0
  %1341 = vmatpush2.msra.mxu0 %v1267
  %1342 = vmatprep.subr.mxu0 0.0
  %1343 = vmatpush2.msra.mxu0 %v1266
  %1344 = vmatprep.subr.mxu0 0.0
  %1345 = vmatpush2.msra.mxu0 %v1265
  %1346 = vmatprep.subr.mxu0 0.0
  %1347 = vmatpush2.msra.mxu0 %v1264
  %1348 = vmatprep.subr.mxu0 0.0
  %1349 = vmatpush2.msra.mxu0 %v1263
  %1350 = vmatprep.subr.mxu0 0.0
  %1351 = vmatpush2.msra.mxu0 %v1262
  %1352 = vmatprep.subr.mxu0 0.0
  %1353 = vmatpush2.msra.mxu0 %v1261
  %1354 = vmatprep.mubr.f32.mxu0 %v1281
  %1355 = vmatmul.mubr.f32.gmra.mxu0 %v1241
  %v1356 = vpop.f32.mrf.mxu0
  %v1357 = vadd.f32 %v1277, %v1356
  %v1358 = vpop.f32.mrf.mxu0
  %1359 = vmatprep.mubr.f32.mxu0 %v1284
  %1360 = vmatmul.mubr.f32.gmra.mxu0 %v1243
  %v1361 = vpop.f32.mrf.mxu0
  %v1362 = vadd.f32 %v1277, %v1361
  %v1363 = vpop.f32.mrf.mxu0
  %1364 = vdwg.mxu0
  %v1365 = vmul.f32 %v1357, %v1235
  %v1366 = vmul.f32 %v1362, %v1238
  %v1367 = vld [vmem:[%s8] sm:$0xff]
  %v1368 = vld [vmem:[%s8 + $0x8] sm:$0xff]
  %v1369 = vld [vmem:[%s8 + $0x10] sm:$0xff]
  %v1370 = vld [vmem:[%s8 + $0x18] sm:$0xff]
  %v1371 = vld [vmem:[%s8 + $0x20] sm:$0xff]
  %v1372 = vld [vmem:[%s8 + $0x28] sm:$0xff]
  %v1373 = vld [vmem:[%s8 + $0x30] sm:$0xff]
  %v1374 = vld [vmem:[%s8 + $0x38] sm:$0xff]
  %v1375 = vld [vmem:[%s8 + $0x40] sm:$0xff]
  %v1376 = vld [vmem:[%s8 + $0x48] sm:$0xff]
  %v1377 = vld [vmem:[%s8 + $0x50] sm:$0xff]
  %v1378 = vld [vmem:[%s8 + $0x58] sm:$0xff]
  %v1379 = vld [vmem:[%s8 + $0x60] sm:$0xf]
  %1382 = vrot.lane.b32.xlu0 %v1235, 28
  %v1383 = vpop.permute.xlu0 %1382
  %1384 = vrot.lane.b32.xlu0 %v1238, 28
  %v1385 = vpop.permute.xlu0 %1384
  %vm1388 = vcmask 818176
  %v1390 = vsel %vm1388, %v1365, 0
  %v1393 = vsel %vm1388, %v1366, 0
  %vm1395 = vcmask 1043456
  %v1397 = vsel %vm1395, %v1379, 0
  %1399 = vmatprep.subr.mxu0 0.0
  %1400 = vmatpush1.msra.mxu0 0.0
  %1401 = vmatprep.subr.mxu0 0.0
  %1402 = vmatpush1.msra.mxu0 0.0
  %1403 = vmatprep.subr.mxu0 0.0
  %1404 = vmatpush1.msra.mxu0 0.0
  %1405 = vmatprep.subr.mxu0 0.0
  %1406 = vmatpush1.msra.mxu0 %v1397
  %1407 = vmatprep.subr.mxu0 0.0
  %1408 = vmatpush1.msra.mxu0 %v1378
  %1409 = vmatprep.subr.mxu0 0.0
  %1410 = vmatpush1.msra.mxu0 %v1377
  %1411 = vmatprep.subr.mxu0 0.0
  %1412 = vmatpush1.msra.mxu0 %v1376
  %1413 = vmatprep.subr.mxu0 0.0
  %1414 = vmatpush1.msra.mxu0 %v1375
  %1415 = vmatprep.subr.mxu0 0.0
  %1416 = vmatpush1.msra.mxu0 %v1374
  %1417 = vmatprep.subr.mxu0 0.0
  %1418 = vmatpush1.msra.mxu0 %v1373
  %1419 = vmatprep.subr.mxu0 0.0
  %1420 = vmatpush1.msra.mxu0 %v1372
  %1421 = vmatprep.subr.mxu0 0.0
  %1422 = vmatpush1.msra.mxu0 %v1371
  %1423 = vmatprep.subr.mxu0 0.0
  %1424 = vmatpush1.msra.mxu0 %v1370
  %1425 = vmatprep.subr.mxu0 0.0
  %1426 = vmatpush1.msra.mxu0 %v1369
  %1427 = vmatprep.subr.mxu0 0.0
  %1428 = vmatpush1.msra.mxu0 %v1368
  %1429 = vmatprep.subr.mxu0 0.0
  %1430 = vmatpush1.msra.mxu0 %v1367
  %1431 = vmatprep.subr.mxu0 0.0
  %1432 = vmatpush2.msra.mxu0 0.0
  %1433 = vmatprep.subr.mxu0 0.0
  %1434 = vmatpush2.msra.mxu0 0.0
  %1435 = vmatprep.subr.mxu0 0.0
  %1436 = vmatpush2.msra.mxu0 0.0
  %1437 = vmatprep.subr.mxu0 0.0
  %1438 = vmatpush2.msra.mxu0 0.0
  %1439 = vmatprep.subr.mxu0 0.0
  %1440 = vmatpush2.msra.mxu0 0.0
  %1441 = vmatprep.subr.mxu0 0.0
  %1442 = vmatpush2.msra.mxu0 0.0
  %1443 = vmatprep.subr.mxu0 0.0
  %1444 = vmatpush2.msra.mxu0 0.0
  %1445 = vmatprep.subr.mxu0 0.0
  %1446 = vmatpush2.msra.mxu0 0.0
  %1447 = vmatprep.subr.mxu0 0.0
  %1448 = vmatpush2.msra.mxu0 0.0
  %1449 = vmatprep.subr.mxu0 0.0
  %1450 = vmatpush2.msra.mxu0 0.0
  %1451 = vmatprep.subr.mxu0 0.0
  %1452 = vmatpush2.msra.mxu0 0.0
  %1453 = vmatprep.subr.mxu0 0.0
  %1454 = vmatpush2.msra.mxu0 0.0
  %1455 = vmatprep.subr.mxu0 0.0
  %1456 = vmatpush2.msra.mxu0 0.0
  %1457 = vmatprep.subr.mxu0 0.0
  %1458 = vmatpush2.msra.mxu0 0.0
  %1459 = vmatprep.subr.mxu0 0.0
  %1460 = vmatpush2.msra.mxu0 0.0
  %1461 = vmatprep.subr.mxu0 0.0
  %1462 = vmatpush2.msra.mxu0 0.0
  %1463 = vmatprep.mubr.f32.mxu0 0.0
  %1464 = vmatmul.mubr.f32.gmra.mxu0 %v1390
  %v1465 = vpop.f32.mrf.mxu0
  %v1466 = vadd.f32 %v1383, %v1465
  %v1467 = vpop.f32.mrf.mxu0
  %1468 = vmatprep.mubr.f32.mxu0 0.0
  %1469 = vmatmul.mubr.f32.gmra.mxu0 %v1393
  %v1470 = vpop.f32.mrf.mxu0
  %v1471 = vadd.f32 %v1385, %v1470
  %v1472 = vpop.f32.mrf.mxu0
  %1473 = vdwg.mxu0
  %vm1474 = vcmask 80896
  %v1475 = vsel %vm1474, %v1466, -inf
  %1476 = vmax.xlane.f32.xlu0 %v1475
  %v1477 = vpop.xlane.xlu0 %1476
  %v1478 = vsel %vm1474, %v1471, -inf
  %1479 = vmax.xlane.f32.xlu0 %v1478
  %v1480 = vpop.xlane.xlu0 %1479
  %v1481 = vsub.f32 %v1466, %v1477
  %v1482 = vsub.f32 %v1471, %v1480
  %v1483 = vmul.f32 %v1481, 1.442695
  %v1484 = vpow.pop %v1483
  %v1485 = vmul.f32 %v1482, 1.442695
  %v1486 = vpow.pop %v1485
  %v1487 = vsel %vm1474, %v1484, 0.0
  %1488 = vadd.xlane.f32.xlu0 %v1487
  %v1489 = vpop.xlane.xlu0 %1488
  %v1490 = vsel %vm1474, %v1486, 0.0
  %1491 = vadd.xlane.f32.xlu0 %v1490
  %v1492 = vpop.xlane.xlu0 %1491
  %v1493 = vrcp.pop %v1489
  %v1494 = vrcp.pop %v1492
  %v1495 = vmul.f32 %v1484, %v1493
  %v1496 = vmul.f32 %v1486, %v1494
  %v1497 = vld [vmem:[%s9] sm:$0xff]
  %v1498 = vld [vmem:[%s9 + $0x8] sm:$0xff]
  %v1499 = vld [vmem:[%s9 + $0x10] sm:$0x3]
  %v1500 = vld [vmem:[%s9 + $0x18] sm:$0x3]
  %v1502 = vsel %vm1474, %v1495, 0
  %v1505 = vsel %vm1474, %v1496, 0
  %v1508 = vsel %vm1286, %v1499, 0
  %v1511 = vsel %vm1286, %v1500, 0
  %1513 = vmatprep.subr.mxu0 0.0
  %1514 = vmatpush1.msra.mxu0 0.0
  %1515 = vmatprep.subr.mxu0 0.0
  %1516 = vmatpush1.msra.mxu0 0.0
  %1517 = vmatprep.subr.mxu0 0.0
  %1518 = vmatpush1.msra.mxu0 0.0
  %1519 = vmatprep.subr.mxu0 0.0
  %1520 = vmatpush1.msra.mxu0 0.0
  %1521 = vmatprep.subr.mxu0 0.0
  %1522 = vmatpush1.msra.mxu0 0.0
  %1523 = vmatprep.subr.mxu0 0.0
  %1524 = vmatpush1.msra.mxu0 0.0
  %1525 = vmatprep.subr.mxu0 0.0
  %1526 = vmatpush1.msra.mxu0 0.0
  %1527 = vmatprep.subr.mxu0 0.0
  %1528 = vmatpush1.msra.mxu0 0.0
  %1529 = vmatprep.subr.mxu0 0.0
  %1530 = vmatpush1.msra.mxu0 0.0
  %1531 = vmatprep.subr.mxu0 0.0
  %1532 = vmatpush1.msra.mxu0 0.0
  %1533 = vmatprep.subr.mxu0 0.0
  %1534 = vmatpush1.msra.mxu0 0.0
  %1535 = vmatprep.subr.mxu0 0.0
  %1536 = vmatpush1.msra.mxu0 0.0
  %1537 = vmatprep.subr.mxu0 0.0
  %1538 = vmatpush1.msra.mxu0 0.0
  %1539 = vmatprep.subr.mxu0 0.0
  %1540 = vmatpush1.msra.mxu0 0.0
  %1541 = vmatprep.subr.mxu0 %v1511
  %1542 = vmatpush1.msra.mxu0 %v1508
  %1543 = vmatprep.subr.mxu0 %v1498
  %1544 = vmatpush1.msra.mxu0 %v1497
  %1545 = vmatprep.subr.mxu0 0.0
  %1546 = vmatpush2.msra.mxu0 0.0
  %1547 = vmatprep.subr.mxu0 0.0
  %1548 = vmatpush2.msra.mxu0 0.0
  %1549 = vmatprep.subr.mxu0 0.0
  %1550 = vmatpush2.msra.mxu0 0.0
  %1551 = vmatprep.subr.mxu0 0.0
  %1552 = vmatpush2.msra.mxu0 0.0
  %1553 = vmatprep.subr.mxu0 0.0
  %1554 = vmatpush2.msra.mxu0 0.0
  %1555 = vmatprep.subr.mxu0 0.0
  %1556 = vmatpush2.msra.mxu0 0.0
  %1557 = vmatprep.subr.mxu0 0.0
  %1558 = vmatpush2.msra.mxu0 0.0
  %1559 = vmatprep.subr.mxu0 0.0
  %1560 = vmatpush2.msra.mxu0 0.0
  %1561 = vmatprep.subr.mxu0 0.0
  %1562 = vmatpush2.msra.mxu0 0.0
  %1563 = vmatprep.subr.mxu0 0.0
  %1564 = vmatpush2.msra.mxu0 0.0
  %1565 = vmatprep.subr.mxu0 0.0
  %1566 = vmatpush2.msra.mxu0 0.0
  %1567 = vmatprep.subr.mxu0 0.0
  %1568 = vmatpush2.msra.mxu0 0.0
  %1569 = vmatprep.subr.mxu0 0.0
  %1570 = vmatpush2.msra.mxu0 0.0
  %1571 = vmatprep.subr.mxu0 0.0
  %1572 = vmatpush2.msra.mxu0 0.0
  %1573 = vmatprep.subr.mxu0 0.0
  %1574 = vmatpush2.msra.mxu0 0.0
  %1575 = vmatprep.subr.mxu0 0.0
  %1576 = vmatpush2.msra.mxu0 0.0
  %1577 = vmatprep.mubr.f32.mxu0 0.0
  %1578 = vmatmul.mubr.f32.gmra.mxu0 %v1502
  %v1579 = vpop.f32.mrf.mxu0
  %v1580 = vadd.f32 0.0, %v1579
  %v1581 = vpop.f32.mrf.mxu0
  %v1582 = vadd.f32 0.0, %v1581
  %1583 = vmatprep.mubr.f32.mxu0 0.0
  %1584 = vmatmul.mubr.f32.gmra.mxu0 %v1505
  %v1585 = vpop.f32.mrf.mxu0
  %v1586 = vadd.f32 0.0, %v1585
  %v1587 = vpop.f32.mrf.mxu0
  %v1588 = vadd.f32 0.0, %v1587
  %1589 = vdwg.mxu0
  %v1590 = vmul.f32 %v1580, %v1241
  %v1591 = vmul.f32 %v1582, %v1242
  %v1592 = vmul.f32 %v1586, %v1243
  %v1593 = vmul.f32 %v1588, %v1244
  %v1594 = vld [vmem:[%s10] sm:$0xff]
  %v1595 = vld [vmem:[%s10 + $0x8] sm:$0xff]
  %v1596 = vld [vmem:[%s10 + $0x10] sm:$0xff]
  %v1597 = vld [vmem:[%s10 + $0x18] sm:$0xff]
  %v1598 = vld [vmem:[%s10 + $0x20] sm:$0xff]
  %v1599 = vld [vmem:[%s10 + $0x28] sm:$0xff]
  %v1600 = vld [vmem:[%s10 + $0x30] sm:$0xff]
  %v1601 = vld [vmem:[%s10 + $0x38] sm:$0xff]
  %v1602 = vld [vmem:[%s10 + $0x40] sm:$0xff]
  %v1603 = vld [vmem:[%s10 + $0x48] sm:$0xff]
  %v1604 = vld [vmem:[%s10 + $0x50] sm:$0xff]
  %v1605 = vld [vmem:[%s10 + $0x58] sm:$0xff]
  %v1606 = vld [vmem:[%s10 + $0x60] sm:$0xff]
  %v1607 = vld [vmem:[%s10 + $0x68] sm:$0xff]
  %v1608 = vld [vmem:[%s10 + $0x70] sm:$0xff]
  %v1609 = vld [vmem:[%s10 + $0x78] sm:$0xff]
  %v1610 = vld [vmem:[%s10 + $0x80] sm:$0xff]
  %v1611 = vld [vmem:[%s10 + $0x88] sm:$0xff]
  %v1612 = vld [vmem:[%s10 + $0x90] sm:$0xff]
  %v1613 = vld [vmem:[%s10 + $0x98] sm:$0xff]
  %v1614 = vld [vmem:[%s10 + $0xa0] sm:$0xff]
  %v1615 = vld [vmem:[%s10 + $0xa8] sm:$0xff]
  %v1616 = vld [vmem:[%s10 + $0xb0] sm:$0xff]
  %v1617 = vld [vmem:[%s10 + $0xb8] sm:$0xff]
  %v1618 = vld [vmem:[%s10 + $0xc0] sm:$0xff]
  %v1619 = vld [vmem:[%s10 + $0xc8] sm:$0xff]
  %v1620 = vld [vmem:[%s10 + $0xd0] sm:$0x3]
  %v1622 = vsel %vm1279, %v1591, 0
  %v1625 = vsel %vm1279, %v1593, 0
  %v1628 = vsel %vm1286, %v1620, 0
  %1630 = vmatprep.subr.mxu0 0.0
  %1631 = vmatpush1.msra.mxu0 %v1609
  %1632 = vmatprep.subr.mxu0 0.0
  %1633 = vmatpush1.msra.mxu0 %v1608
  %1634 = vmatprep.subr.mxu0 0.0
  %1635 = vmatpush1.msra.mxu0 %v1607
  %1636 = vmatprep.subr.mxu0 0.0
  %1637 = vmatpush1.msra.mxu0 %v1606
  %1638 = vmatprep.subr.mxu0 0.0
  %1639 = vmatpush1.msra.mxu0 %v1605
  %1640 = vmatprep.subr.mxu0 0.0
  %1641 = vmatpush1.msra.mxu0 %v1604
  %1642 = vmatprep.subr.mxu0 0.0
  %1643 = vmatpush1.msra.mxu0 %v1603
  %1644 = vmatprep.subr.mxu0 0.0
  %1645 = vmatpush1.msra.mxu0 %v1602
  %1646 = vmatprep.subr.mxu0 0.0
  %1647 = vmatpush1.msra.mxu0 %v1601
  %1648 = vmatprep.subr.mxu0 0.0
  %1649 = vmatpush1.msra.mxu0 %v1600
  %1650 = vmatprep.subr.mxu0 0.0
  %1651 = vmatpush1.msra.mxu0 %v1599
  %1652 = vmatprep.subr.mxu0 0.0
  %1653 = vmatpush1.msra.mxu0 %v1598
  %1654 = vmatprep.subr.mxu0 0.0
  %1655 = vmatpush1.msra.mxu0 %v1597
  %1656 = vmatprep.subr.mxu0 0.0
  %1657 = vmatpush1.msra.mxu0 %v1596
  %1658 = vmatprep.subr.mxu0 0.0
  %1659 = vmatpush1.msra.mxu0 %v1595
  %1660 = vmatprep.subr.mxu0 0.0
  %1661 = vmatpush1.msra.mxu0 %v1594
  %1662 = vmatprep.subr.mxu0 0.0
  %1663 = vmatpush2.msra.mxu0 0.0
  %1664 = vmatprep.subr.mxu0 0.0
  %1665 = vmatpush2.msra.mxu0 0.0
  %1666 = vmatprep.subr.mxu0 0.0
  %1667 = vmatpush2.msra.mxu0 0.0
  %1668 = vmatprep.subr.mxu0 0.0
  %1669 = vmatpush2.msra.mxu0 0.0
  %1670 = vmatprep.subr.mxu0 0.0
  %1671 = vmatpush2.msra.mxu0 0.0
  %1672 = vmatprep.subr.mxu0 0.0
  %1673 = vmatpush2.msra.mxu0 %v1628
  %1674 = vmatprep.subr.mxu0 0.0
  %1675 = vmatpush2.msra.mxu0 %v1619
  %1676 = vmatprep.subr.mxu0 0.0
  %1677 = vmatpush2.msra.mxu0 %v1618
  %1678 = vmatprep.subr.mxu0 0.0
  %1679 = vmatpush2.msra.mxu0 %v1617
  %1680 = vmatprep.subr.mxu0 0.0
  %1681 = vmatpush2.msra.mxu0 %v1616
  %1682 = vmatprep.subr.mxu0 0.0
  %1683 = vmatpush2.msra.mxu0 %v1615
  %1684 = vmatprep.subr.mxu0 0.0
  %1685 = vmatpush2.msra.mxu0 %v1614
  %1686 = vmatprep.subr.mxu0 0.0
  %1687 = vmatpush2.msra.mxu0 %v1613
  %1688 = vmatprep.subr.mxu0 0.0
  %1689 = vmatpush2.msra.mxu0 %v1612
  %1690 = vmatprep.subr.mxu0 0.0
  %1691 = vmatpush2.msra.mxu0 %v1611
  %1692 = vmatprep.subr.mxu0 0.0
  %1693 = vmatpush2.msra.mxu0 %v1610
  %1694 = vmatprep.mubr.f32.mxu0 %v1622
  %1695 = vmatmul.mubr.f32.gmra.mxu0 %v1590
  %v1696 = vpop.f32.mrf.mxu0
  %v1697 = vadd.f32 0.0, %v1696
  %v1698 = vpop.f32.mrf.mxu0
  %1699 = vmatprep.mubr.f32.mxu0 %v1625
  %1700 = vmatmul.mubr.f32.gmra.mxu0 %v1592
  %v1701 = vpop.f32.mrf.mxu0
  %v1702 = vadd.f32 0.0, %v1701
  %v1703 = vpop.f32.mrf.mxu0
  %1704 = vdwg.mxu0
  %1707 = vrot.lane.b32.xlu0 %v1697, 110
  %v1708 = vpop.permute.xlu0 %1707
  %1709 = vrot.lane.b32.xlu0 %v1702, 110
  %v1710 = vpop.permute.xlu0 %1709
  %v1713 = vadd.f32 %v1235, %v1708
  %v1714 = vadd.f32 %v1238, %v1710
  %1717 = vrot.lane.b32.xlu0 %v1713, 28
  %v1718 = vpop.permute.xlu0 %1717
  %1719 = vrot.lane.b32.xlu0 %v1714, 28
  %v1720 = vpop.permute.xlu0 %1719
  %v1723 = vsel %vm1474, %v1466, %v1718
  %v1724 = vsel %vm1474, %v1471, %v1720
  %vm1725 = vcmask 121856
  %1726 = vst.msk [vmem:[%s11] sm:$0xff] %vm1725, %v1723
  %1727 = vst.msk [vmem:[%s11 + $0x8] sm:$0xff] %vm1725, %v1724
  // Predicated region
  $region46: #{control_groups_output.1} parent=0 // pred_check
    _
  $region47: #{control_groups_output.1} parent=0 // pred_check_branch
    %1729 = sbr.rel (0) target = $region49
  $region48: #{control_groups_output.1} parent=0 // pred_region
    _
  $region49: #{control_groups_output.1} parent=0 // pred_fallthru
    _
  // Predicated region
  $region50: #{control_groups_output.1} parent=0 // pred_check
    _
  $region51: #{control_groups_output.1} parent=0 // pred_check_branch
    %1731 = sbr.rel (0) target = $region53
  $region52: #{control_groups_output.1} parent=0 // pred_region
    _
  $region53: #{control_groups_output.1} parent=0 // pred_fallthru
    _

</llo_original>
